<compile_context>
chip_gen: v6e
topology: v6e:2x2x1
jax: 0.10.0
libtpu: 0.0.40
codegen_flags: <defaults>
</compile_context>

<pallas_src>
import jax
import jax.numpy as jnp
import numpy as np
from jax.experimental import pallas as pl
from jax.experimental.pallas import tpu as pltpu

_MiB = 1024 * 1024


def _round_up(v, m):
    return ((v + m - 1) // m) * m


# ----------------------------------------------------------------------------
# Kernel
# ----------------------------------------------------------------------------
def _pre_extraction_kernel(x_ref, wt_ref, bt_ref, w1_ref, b1_ref, w2_ref, b2_ref, o_ref):
    """One grid step processes TP neighbor-groups of one batch element.

    x_ref : (1, TP, S, D) bf16     grouped points, channels-last
    wt/bt : (D, C) bf16 / (1, C) f32           transfer Conv+BN folded
    w1/b1 : (nblk, C, C) bf16 / (nblk, 1, C) f32
    w2/b2 : (nblk, C, C) bf16 / (nblk, 1, C) f32
    o_ref : (1, C, TP) f32         pooled output (channels x groups slab)
    """
    tp, s, d = x_ref.shape[1], x_ref.shape[2], x_ref.shape[3]

    # (TP, S, D) -> (TP*S, D): merging leading dims is a free layout change
    # when S % 8 == 0 (S = 16/24/32 in PointMLP); otherwise it costs a copy.
    x = x_ref[0].reshape(tp * s, d)                           # bf16 already

    # transfer: Conv1d(k=1) + folded BN + ReLU  (bf16 MXU, f32 accumulate)
    h = jnp.dot(x, wt_ref[...], preferred_element_type=jnp.float32) + bt_ref[...]
    h = jnp.maximum(h, 0.0)                                   # (TP*S, C) f32

    # residual blocks (static trace-time loop over block index)
    nblk = w1_ref.shape[0]
    for k in range(nblk):
        h1 = jnp.dot(h.astype(jnp.bfloat16), w1_ref[k],
                     preferred_element_type=jnp.float32) + b1_ref[k]
        h1 = jnp.maximum(h1, 0.0)
        h2 = jnp.dot(h1.astype(jnp.bfloat16), w2_ref[k],
                     preferred_element_type=jnp.float32) + b2_ref[k]
        h = jnp.maximum(h2 + h, 0.0)

    # adaptive_max_pool1d(., 1): max over the S (points-per-group) axis.
    pooled = jnp.max(h.reshape(tp, s, -1), axis=1)            # (TP, C)

    # Store transposed so the output array is already (b, C, n):
    # lane-dense stores when TP >= 128, and no post-kernel transpose.
    o_ref[0] = pooled.T                                       # (C, TP)


# ----------------------------------------------------------------------------
# Tiling / VMEM heuristics
# ----------------------------------------------------------------------------
def _vmem_capacity_bytes():
    try:
        return int(pltpu.get_tpu_info().vmem_capacity_bytes)
    except Exception:
        return 64 * _MiB  # conservative: v7x per-TensorCore capacity


def _vmem_estimate(tp, s, d, C, nblk):
    """Layout-padding-aware per-step VMEM estimate (bytes).

    Last dim of each tile is rounded up to 128 lanes; second-to-last to the
    dtype sublane multiple (8 for f32, 16 for bf16)."""
    rows = tp * s
    x_tile = tp * _round_up(s, 16) * _round_up(d, 128) * 2            # bf16 in tile
    out_tile = _round_up(C, 8) * _round_up(tp, 128) * 4               # f32 out tile
    wt = _round_up(d, 16) * _round_up(C, 128) * 2                     # bf16
    wblk = 2 * nblk * _round_up(C, 16) * _round_up(C, 128) * 2        # bf16
    biases = (1 + 2 * nblk) * 8 * _round_up(C, 128) * 4               # f32
    act = _round_up(rows, 8) * _round_up(C, 128) * 4                  # one f32 slab
    x_flat = _round_up(rows, 16) * _round_up(d, 128) * 2              # flattened bf16 x
    return (
        2 * x_tile                       # x tile, double-buffered
        + 2 * out_tile                   # out tile, double-buffered
        + 2 * (wt + wblk + biases)       # weights (counted 2x: covers fallback buffering)
        + 4 * act + x_flat               # h / h1 / h2 / pooled working set
    )


def _choose_tp(n_pad, s, d, C, nblk, vmem_budget, prefer_multi_step):
    """Pick TP | n_pad so the (C, TP) output block is legal (TP == n_pad or
    TP % 128 == 0), the padded working set fits the VMEM budget, and (when
    requested) the grid keeps >= 2 steps so both v7x cores get work."""
    if n_pad <= 128:
        return n_pad
    cands = sorted(t for t in range(128, n_pad + 1, 128) if n_pad % t == 0)
    fitting = [t for t in cands if _vmem_estimate(t, s, d, C, nblk) <= vmem_budget]
    if not fitting:
        fitting = [cands[0]]
    if prefer_multi_step:
        multi = [t for t in fitting if n_pad // t >= 2]
        if multi:
            return max(multi)
    return max(fitting)


# ----------------------------------------------------------------------------
# Wrapper
# ----------------------------------------------------------------------------
def pre_extraction_pallas(x, wt, bt, w1s, b1s, w2s, b2s):
    """x: (b, n, s, d) float32 (or bf16). Returns (b, C, n) float32."""
    b, n, s, d = x.shape
    C = wt.shape[1]
    nblk = w1s.shape[0]

    # Pad n up to a multiple of 128 when no lane-dense TP would divide it, so
    # the output slab stays unmasked and the working set stays bounded; padded
    # groups compute garbage that is sliced off below.
    if n > 128 and n % 128 != 0:
        n_pad = _round_up(n, 128)
        x = jnp.pad(x, ((0, 0), (0, n_pad - n), (0, 0), (0, 0)))
    else:
        n_pad = n

    cap = _vmem_capacity_bytes()
    vmem_budget = min(int(0.70 * cap), 100 * _MiB)   # ~45 MiB on v7x, ~90 MiB on v5e/v6e

    tp = _choose_tp(n_pad, s, d, C, nblk, vmem_budget, prefer_multi_step=(b == 1))
    grid = (b, n_pad // tp)

    # bf16 input: halves the dominant HBM->VMEM traffic (weights are resident).
    x = x.astype(jnp.bfloat16)

    est = _vmem_estimate(tp, s, d, C, nblk)
    vmem_limit = int(min(max(int(1.4 * est), 32 * _MiB), vmem_budget))

    def build(single_buffer_weights):
        # Constant index_maps -> weights are never re-fetched; Buffered(1)
        # drops the dead second pipeline copy (meaningful against v7x's 64 MiB).
        wkw = dict(pipeline_mode=pl.Buffered(1)) if single_buffer_weights else {}
        grid_spec = pltpu.PrefetchScalarGridSpec(
            num_scalar_prefetch=0,
            grid=grid,
            in_specs=[
                # TODO(synk): if profiling on v5e shows exposed DMA, bump this
                # x spec to pipeline_mode=pl.Buffered(3).
                pl.BlockSpec((1, tp, s, d), lambda bi, ni: (bi, ni, 0, 0)),
                pl.BlockSpec((d, C), lambda bi, ni: (0, 0), **wkw),
                pl.BlockSpec((1, C), lambda bi, ni: (0, 0), **wkw),
                pl.BlockSpec((nblk, C, C), lambda bi, ni: (0, 0, 0), **wkw),
                pl.BlockSpec((nblk, 1, C), lambda bi, ni: (0, 0, 0), **wkw),
                pl.BlockSpec((nblk, C, C), lambda bi, ni: (0, 0, 0), **wkw),
                pl.BlockSpec((nblk, 1, C), lambda bi, ni: (0, 0, 0), **wkw),
            ],
            out_specs=pl.BlockSpec((1, C, tp), lambda bi, ni: (bi, 0, ni)),
        )
        return pl.pallas_call(
            _pre_extraction_kernel,
            out_shape=jax.ShapeDtypeStruct((b, C, n_pad), jnp.float32),
            grid_spec=grid_spec,
            compiler_params=pltpu.CompilerParams(
                dimension_semantics=("parallel", "parallel"),
                vmem_limit_bytes=vmem_limit,
            ),
        )(x, wt, bt, w1s, b1s, w2s, b2s)

    try:
        out = jax.block_until_ready(build(True))
    except Exception:
        # Fallback: default (double-buffered) weight specs.
        out = build(False)

    if n_pad != n:
        out = out[:, :, :n]
    return out  # already (b, C, n) == x.reshape(b, n, -1).permute(0, 2, 1)


# ----------------------------------------------------------------------------
# Parameters (BN folded) and pure-JAX reference
# ----------------------------------------------------------------------------
def _fold_bn(w, bias, gamma, beta, mean, var, eps=1e-5):
    """Fold eval-mode BatchNorm1d into a 1x1 Conv1d. w: (Cout, Cin)."""
    scale = gamma / jnp.sqrt(var + eps)
    w_eff = w * scale[:, None]
    b_eff = (bias - mean) * scale + beta
    return w_eff, b_eff


def make_params(key, in_channels, out_channels, blocks):
    """Deterministic synthetic parameters (conv + BN per layer), BN folded.

    Weights are returned pre-transposed to (Cin, Cout) and cast to bf16 for
    the MXU path; biases stay f32."""
    keys = jax.random.split(key, 4 + 8 * blocks)
    ki = iter(keys)

    def conv(kin, kout):
        w = jax.random.normal(next(ki), (kout, kin), jnp.float32) * 0.2
        b = jax.random.normal(next(ki), (kout,), jnp.float32) * 0.1
        return w, b

    def bn(c):
        gamma = 1.0 + 0.1 * jax.random.normal(next(ki), (c,), jnp.float32)
        beta = 0.1 * jax.random.normal(next(ki), (c,), jnp.float32)
        mean = 0.05 * jnp.arange(c, dtype=jnp.float32)
        var = 1.0 + 0.01 * jnp.arange(c, dtype=jnp.float32)
        return gamma, beta, mean, var

    # transfer: ConvBNReLU1D(in_channels -> out_channels)
    w, b = conv(in_channels, out_channels)
    w_eff, b_eff = _fold_bn(w, b, *bn(out_channels))
    wt = w_eff.T.astype(jnp.bfloat16)                 # (D, C) bf16
    bt = b_eff.reshape(1, out_channels)               # (1, C) f32

    w1s, b1s, w2s, b2s = [], [], [], []
    for _ in range(blocks):
        # net1: Conv(C->C) + BN + ReLU
        w, b = conv(out_channels, out_channels)
        w_eff, b_eff = _fold_bn(w, b, *bn(out_channels))
        w1s.append(w_eff.T.astype(jnp.bfloat16))
        b1s.append(b_eff.reshape(1, out_channels))
        # net2: Conv(C->C) + BN
        w, b = conv(out_channels, out_channels)
        w_eff, b_eff = _fold_bn(w, b, *bn(out_channels))
        w2s.append(w_eff.T.astype(jnp.bfloat16))
        b2s.append(b_eff.reshape(1, out_channels))

    return (wt, bt,
            jnp.stack(w1s), jnp.stack(b1s),
            jnp.stack(w2s), jnp.stack(b2s))


def reference(x, wt, bt, w1s, b1s, w2s, b2s):
    """Pure-JAX reference of the same (BN-folded, bf16-matmul / f32-acc) pass."""
    b, n, s, d = x.shape
    xr = x.reshape(b * n, s, d).astype(jnp.bfloat16)
    h = jnp.einsum("psd,dc->psc", xr, wt,
                   preferred_element_type=jnp.float32) + bt
    h = jnp.maximum(h, 0.0)
    for k in range(w1s.shape[0]):
        h1 = jnp.einsum("psc,cf->psf", h.astype(jnp.bfloat16), w1s[k],
                        preferred_element_type=jnp.float32) + b1s[k]
        h1 = jnp.maximum(h1, 0.0)
        h2 = jnp.einsum("psc,cf->psf", h1.astype(jnp.bfloat16), w2s[k],
                        preferred_element_type=jnp.float32) + b2s[k]
        h = jnp.maximum(h2 + h, 0.0)
    pooled = jnp.max(h, axis=1)                       # (b*n, C)
    return pooled.reshape(b, n, -1).transpose(0, 2, 1)


if __name__ == "__main__":
    # Small shapes consistent with PreExtraction(channels=8, out_channels=32,
    # blocks=2, use_xyz=True): in_channels = 3 + 2*channels = 19.
    b, n, s = 2, 4, 16
    channels, out_channels, blocks = 8, 32, 2
    in_channels = 3 + 2 * channels  # use_xyz=True

    key = jax.random.PRNGKey(0)
    kx, kp = jax.random.split(key)
    x = jax.random.normal(kx, (b, n, s, in_channels), jnp.float32)
    params = make_params(kp, in_channels, out_channels, blocks)

    out = pre_extraction_pallas(x, *params)
    out = jax.block_until_ready(out)

    ref = reference(x, *params)
    assert out.shape == (b, out_channels, n), out.shape
    np.testing.assert_allclose(np.asarray(out), np.asarray(ref), rtol=1e-3, atol=1e-3)

    print("KERNEL_OK")
</pallas_src>

<mosaic_0001>
module attributes {stable_mosaic.version = 11 : i64} {
  func.func @_pre_extraction_kernel(%arg0: i32, %arg1: i32, %arg2: memref<1x4x16x19xbf16, #tpu.memory_space<vmem>>, %arg3: memref<19x32xbf16, #tpu.memory_space<vmem>>, %arg4: memref<1x32xf32, #tpu.memory_space<vmem>>, %arg5: memref<2x32x32xbf16, #tpu.memory_space<vmem>>, %arg6: memref<2x1x32xf32, #tpu.memory_space<vmem>>, %arg7: memref<2x32x32xbf16, #tpu.memory_space<vmem>>, %arg8: memref<2x1x32xf32, #tpu.memory_space<vmem>>, %arg9: memref<1x32x4xf32, #tpu.memory_space<vmem>>) attributes {dimension_semantics = [#tpu.dimension_semantics<parallel>, #tpu.dimension_semantics<parallel>], iteration_bounds = array<i64: 2, 1>, scalar_prefetch = 0 : i64, scratch_operands = 0 : i64, tpu.core_type = #tpu.core_type<tc>, window_params = [{transform_indices = @transform_0, window_bounds = array<i64: 1, 4, 16, 19>}, {pipeline_mode = #tpu.pipeline_mode<synchronous>, transform_indices = @transform_1, window_bounds = array<i64: 19, 32>}, {pipeline_mode = #tpu.pipeline_mode<synchronous>, transform_indices = @transform_2, window_bounds = array<i64: 1, 32>}, {pipeline_mode = #tpu.pipeline_mode<synchronous>, transform_indices = @transform_3, window_bounds = array<i64: 2, 32, 32>}, {pipeline_mode = #tpu.pipeline_mode<synchronous>, transform_indices = @transform_4, window_bounds = array<i64: 2, 1, 32>}, {pipeline_mode = #tpu.pipeline_mode<synchronous>, transform_indices = @transform_5, window_bounds = array<i64: 2, 32, 32>}, {pipeline_mode = #tpu.pipeline_mode<synchronous>, transform_indices = @transform_6, window_bounds = array<i64: 2, 1, 32>}, {transform_indices = @transform_7, window_bounds = array<i64: 1, 32, 4>}]} {
    %c0 = arith.constant 0 : index
    %c0_0 = arith.constant 0 : index
    %c0_1 = arith.constant 0 : index
    %c0_2 = arith.constant 0 : index
    %0 = vector.load %arg2[%c0, %c0_0, %c0_1, %c0_2] : memref<1x4x16x19xbf16, #tpu.memory_space<vmem>>, vector<1x4x16x19xbf16>
    %1 = vector.shape_cast %0 : vector<1x4x16x19xbf16> to vector<4x16x19xbf16>
    %2 = vector.shape_cast %1 : vector<4x16x19xbf16> to vector<64x19xbf16>
    %c0_3 = arith.constant 0 : index
    %c0_4 = arith.constant 0 : index
    %3 = vector.load %arg3[%c0_3, %c0_4] : memref<19x32xbf16, #tpu.memory_space<vmem>>, vector<19x32xbf16>
    %cst = arith.constant dense<0.000000e+00> : vector<64x32xf32>
    %4 = tpu.matmul %2, %3, %cst {dimension_numbers = #tpu.dot_dimension_numbers<[1], [0], [0], [1], [0, 0, 1, 1], [], []>} : vector<64x19xbf16>, vector<19x32xbf16>, vector<64x32xf32> -> vector<64x32xf32>
    %c0_5 = arith.constant 0 : index
    %c0_6 = arith.constant 0 : index
    %5 = vector.load %arg4[%c0_5, %c0_6] : memref<1x32xf32, #tpu.memory_space<vmem>>, vector<1x32xf32>
    %6 = vector.broadcast %5 : vector<1x32xf32> to vector<64x32xf32>
    %7 = arith.addf %4, %6 : vector<64x32xf32>
    %cst_7 = arith.constant 0.000000e+00 : f32
    %8 = vector.broadcast %cst_7 : f32 to vector<64x32xf32>
    %9 = arith.maximumf %7, %8 : vector<64x32xf32>
    %10 = arith.truncf %9 : vector<64x32xf32> to vector<64x32xbf16>
    %c0_8 = arith.constant 0 : index
    %c0_9 = arith.constant 0 : index
    %c0_10 = arith.constant 0 : index
    %11 = vector.load %arg5[%c0_8, %c0_9, %c0_10] : memref<2x32x32xbf16, #tpu.memory_space<vmem>>, vector<1x32x32xbf16>
    %12 = vector.shape_cast %11 : vector<1x32x32xbf16> to vector<32x32xbf16>
    %cst_11 = arith.constant dense<0.000000e+00> : vector<64x32xf32>
    %13 = tpu.matmul %10, %12, %cst_11 {dimension_numbers = #tpu.dot_dimension_numbers<[1], [0], [0], [1], [0, 0, 1, 1], [], []>} : vector<64x32xbf16>, vector<32x32xbf16>, vector<64x32xf32> -> vector<64x32xf32>
    %c0_12 = arith.constant 0 : index
    %c0_13 = arith.constant 0 : index
    %c0_14 = arith.constant 0 : index
    %14 = vector.load %arg6[%c0_12, %c0_13, %c0_14] : memref<2x1x32xf32, #tpu.memory_space<vmem>>, vector<1x1x32xf32>
    %15 = vector.shape_cast %14 : vector<1x1x32xf32> to vector<1x32xf32>
    %16 = vector.broadcast %15 : vector<1x32xf32> to vector<64x32xf32>
    %17 = arith.addf %13, %16 : vector<64x32xf32>
    %cst_15 = arith.constant 0.000000e+00 : f32
    %18 = vector.broadcast %cst_15 : f32 to vector<64x32xf32>
    %19 = arith.maximumf %17, %18 : vector<64x32xf32>
    %20 = arith.truncf %19 : vector<64x32xf32> to vector<64x32xbf16>
    %c0_16 = arith.constant 0 : index
    %c0_17 = arith.constant 0 : index
    %c0_18 = arith.constant 0 : index
    %21 = vector.load %arg7[%c0_16, %c0_17, %c0_18] : memref<2x32x32xbf16, #tpu.memory_space<vmem>>, vector<1x32x32xbf16>
    %22 = vector.shape_cast %21 : vector<1x32x32xbf16> to vector<32x32xbf16>
    %cst_19 = arith.constant dense<0.000000e+00> : vector<64x32xf32>
    %23 = tpu.matmul %20, %22, %cst_19 {dimension_numbers = #tpu.dot_dimension_numbers<[1], [0], [0], [1], [0, 0, 1, 1], [], []>} : vector<64x32xbf16>, vector<32x32xbf16>, vector<64x32xf32> -> vector<64x32xf32>
    %c0_20 = arith.constant 0 : index
    %c0_21 = arith.constant 0 : index
    %c0_22 = arith.constant 0 : index
    %24 = vector.load %arg8[%c0_20, %c0_21, %c0_22] : memref<2x1x32xf32, #tpu.memory_space<vmem>>, vector<1x1x32xf32>
    %25 = vector.shape_cast %24 : vector<1x1x32xf32> to vector<1x32xf32>
    %26 = vector.broadcast %25 : vector<1x32xf32> to vector<64x32xf32>
    %27 = arith.addf %23, %26 : vector<64x32xf32>
    %28 = arith.addf %27, %9 : vector<64x32xf32>
    %cst_23 = arith.constant 0.000000e+00 : f32
    %29 = vector.broadcast %cst_23 : f32 to vector<64x32xf32>
    %30 = arith.maximumf %28, %29 : vector<64x32xf32>
    %31 = arith.truncf %30 : vector<64x32xf32> to vector<64x32xbf16>
    %c1 = arith.constant 1 : index
    %c0_24 = arith.constant 0 : index
    %c0_25 = arith.constant 0 : index
    %32 = vector.load %arg5[%c1, %c0_24, %c0_25] : memref<2x32x32xbf16, #tpu.memory_space<vmem>>, vector<1x32x32xbf16>
    %33 = vector.shape_cast %32 : vector<1x32x32xbf16> to vector<32x32xbf16>
    %cst_26 = arith.constant dense<0.000000e+00> : vector<64x32xf32>
    %34 = tpu.matmul %31, %33, %cst_26 {dimension_numbers = #tpu.dot_dimension_numbers<[1], [0], [0], [1], [0, 0, 1, 1], [], []>} : vector<64x32xbf16>, vector<32x32xbf16>, vector<64x32xf32> -> vector<64x32xf32>
    %c1_27 = arith.constant 1 : index
    %c0_28 = arith.constant 0 : index
    %c0_29 = arith.constant 0 : index
    %35 = vector.load %arg6[%c1_27, %c0_28, %c0_29] : memref<2x1x32xf32, #tpu.memory_space<vmem>>, vector<1x1x32xf32>
    %36 = vector.shape_cast %35 : vector<1x1x32xf32> to vector<1x32xf32>
    %37 = vector.broadcast %36 : vector<1x32xf32> to vector<64x32xf32>
    %38 = arith.addf %34, %37 : vector<64x32xf32>
    %cst_30 = arith.constant 0.000000e+00 : f32
    %39 = vector.broadcast %cst_30 : f32 to vector<64x32xf32>
    %40 = arith.maximumf %38, %39 : vector<64x32xf32>
    %41 = arith.truncf %40 : vector<64x32xf32> to vector<64x32xbf16>
    %c1_31 = arith.constant 1 : index
    %c0_32 = arith.constant 0 : index
    %c0_33 = arith.constant 0 : index
    %42 = vector.load %arg7[%c1_31, %c0_32, %c0_33] : memref<2x32x32xbf16, #tpu.memory_space<vmem>>, vector<1x32x32xbf16>
    %43 = vector.shape_cast %42 : vector<1x32x32xbf16> to vector<32x32xbf16>
    %cst_34 = arith.constant dense<0.000000e+00> : vector<64x32xf32>
    %44 = tpu.matmul %41, %43, %cst_34 {dimension_numbers = #tpu.dot_dimension_numbers<[1], [0], [0], [1], [0, 0, 1, 1], [], []>} : vector<64x32xbf16>, vector<32x32xbf16>, vector<64x32xf32> -> vector<64x32xf32>
    %c1_35 = arith.constant 1 : index
    %c0_36 = arith.constant 0 : index
    %c0_37 = arith.constant 0 : index
    %45 = vector.load %arg8[%c1_35, %c0_36, %c0_37] : memref<2x1x32xf32, #tpu.memory_space<vmem>>, vector<1x1x32xf32>
    %46 = vector.shape_cast %45 : vector<1x1x32xf32> to vector<1x32xf32>
    %47 = vector.broadcast %46 : vector<1x32xf32> to vector<64x32xf32>
    %48 = arith.addf %44, %47 : vector<64x32xf32>
    %49 = arith.addf %48, %30 : vector<64x32xf32>
    %cst_38 = arith.constant 0.000000e+00 : f32
    %50 = vector.broadcast %cst_38 : f32 to vector<64x32xf32>
    %51 = arith.maximumf %49, %50 : vector<64x32xf32>
    %52 = vector.shape_cast %51 : vector<64x32xf32> to vector<4x16x32xf32>
    %cst_39 = arith.constant dense<0xFF800000> : vector<4x32xf32>
    %53 = vector.multi_reduction <maximumf>, %52, %cst_39 [1] : vector<4x16x32xf32> to vector<4x32xf32>
    %54 = tpu.transpose %53, [1, 0] : vector<4x32xf32> -> vector<32x4xf32>
    %c0_40 = arith.constant 0 : index
    %c0_41 = arith.constant 0 : index
    %c0_42 = arith.constant 0 : index
    %55 = vector.load %arg9[%c0_40, %c0_41, %c0_42] : memref<1x32x4xf32, #tpu.memory_space<vmem>>, vector<1x32x4xf32>
    %56 = vector.shape_cast %55 : vector<1x32x4xf32> to vector<32x4xf32>
    %57 = vector.shape_cast %54 : vector<32x4xf32> to vector<1x32x4xf32>
    tpu.vector_store %arg9[%c0_40, %c0_41, %c0_42], %57 {strides = array<i32>} : memref<1x32x4xf32, #tpu.memory_space<vmem>>, vector<1x32x4xf32>,
    return
  }
  func.func @transform_0(%arg0: i32, %arg1: i32) -> (i32, i32, i32, i32) {
    %c0_i32 = arith.constant 0 : i32
    %c0_i32_0 = arith.constant 0 : i32
    %c0_i32_1 = arith.constant 0 : i32
    return %arg0, %arg1, %c0_i32, %c0_i32_0 : i32, i32, i32, i32
  }
  func.func @transform_1(%arg0: i32, %arg1: i32) -> (i32, i32) {
    %c0_i32 = arith.constant 0 : i32
    %c0_i32_0 = arith.constant 0 : i32
    %c0_i32_1 = arith.constant 0 : i32
    return %c0_i32, %c0_i32_0 : i32, i32
  }
  func.func @transform_2(%arg0: i32, %arg1: i32) -> (i32, i32) {
    %c0_i32 = arith.constant 0 : i32
    %c0_i32_0 = arith.constant 0 : i32
    %c0_i32_1 = arith.constant 0 : i32
    return %c0_i32, %c0_i32_0 : i32, i32
  }
  func.func @transform_3(%arg0: i32, %arg1: i32) -> (i32, i32, i32) {
    %c0_i32 = arith.constant 0 : i32
    %c0_i32_0 = arith.constant 0 : i32
    %c0_i32_1 = arith.constant 0 : i32
    %c0_i32_2 = arith.constant 0 : i32
    return %c0_i32, %c0_i32_0, %c0_i32_1 : i32, i32, i32
  }
  func.func @transform_4(%arg0: i32, %arg1: i32) -> (i32, i32, i32) {
    %c0_i32 = arith.constant 0 : i32
    %c0_i32_0 = arith.constant 0 : i32
    %c0_i32_1 = arith.constant 0 : i32
    %c0_i32_2 = arith.constant 0 : i32
    return %c0_i32, %c0_i32_0, %c0_i32_1 : i32, i32, i32
  }
  func.func @transform_5(%arg0: i32, %arg1: i32) -> (i32, i32, i32) {
    %c0_i32 = arith.constant 0 : i32
    %c0_i32_0 = arith.constant 0 : i32
    %c0_i32_1 = arith.constant 0 : i32
    %c0_i32_2 = arith.constant 0 : i32
    return %c0_i32, %c0_i32_0, %c0_i32_1 : i32, i32, i32
  }
  func.func @transform_6(%arg0: i32, %arg1: i32) -> (i32, i32, i32) {
    %c0_i32 = arith.constant 0 : i32
    %c0_i32_0 = arith.constant 0 : i32
    %c0_i32_1 = arith.constant 0 : i32
    %c0_i32_2 = arith.constant 0 : i32
    return %c0_i32, %c0_i32_0, %c0_i32_1 : i32, i32, i32
  }
  func.func @transform_7(%arg0: i32, %arg1: i32) -> (i32, i32, i32) {
    %c0_i32 = arith.constant 0 : i32
    %c0_i32_0 = arith.constant 0 : i32
    return %arg0, %c0_i32, %arg1 : i32, i32, i32
  }
}

module attributes {stable_mosaic.version = 11 : i64} {
  func.func @_pre_extraction_kernel(%arg0: i32, %arg1: i32, %arg2: memref<1x4x16x19xbf16, #tpu.memory_space<vmem>>, %arg3: memref<19x32xbf16, #tpu.memory_space<vmem>>, %arg4: memref<1x32xf32, #tpu.memory_space<vmem>>, %arg5: memref<2x32x32xbf16, #tpu.memory_space<vmem>>, %arg6: memref<2x1x32xf32, #tpu.memory_space<vmem>>, %arg7: memref<2x32x32xbf16, #tpu.memory_space<vmem>>, %arg8: memref<2x1x32xf32, #tpu.memory_space<vmem>>, %arg9: memref<1x32x4xf32, #tpu.memory_space<vmem>>) attributes {dimension_semantics = [#tpu.dimension_semantics<parallel>, #tpu.dimension_semantics<parallel>], iteration_bounds = array<i64: 2, 1>, scalar_prefetch = 0 : i64, scratch_operands = 0 : i64, tpu.core_type = #tpu.core_type<tc>, window_params = [{transform_indices = @transform_0, window_bounds = array<i64: 1, 4, 16, 19>}, {pipeline_mode = #tpu.pipeline_mode<synchronous>, transform_indices = @transform_1, window_bounds = array<i64: 19, 32>}, {pipeline_mode = #tpu.pipeline_mode<synchronous>, transform_indices = @transform_2, window_bounds = array<i64: 1, 32>}, {pipeline_mode = #tpu.pipeline_mode<synchronous>, transform_indices = @transform_3, window_bounds = array<i64: 2, 32, 32>}, {pipeline_mode = #tpu.pipeline_mode<synchronous>, transform_indices = @transform_4, window_bounds = array<i64: 2, 1, 32>}, {pipeline_mode = #tpu.pipeline_mode<synchronous>, transform_indices = @transform_5, window_bounds = array<i64: 2, 32, 32>}, {pipeline_mode = #tpu.pipeline_mode<synchronous>, transform_indices = @transform_6, window_bounds = array<i64: 2, 1, 32>}, {transform_indices = @transform_7, window_bounds = array<i64: 1, 32, 4>}]} {
    %c0 = arith.constant 0 : index
    %c0_0 = arith.constant 0 : index
    %c0_1 = arith.constant 0 : index
    %c0_2 = arith.constant 0 : index
    %0 = vector.load %arg2[%c0, %c0_0, %c0_1, %c0_2] : memref<1x4x16x19xbf16, #tpu.memory_space<vmem>>, vector<1x4x16x19xbf16>
    %1 = vector.shape_cast %0 : vector<1x4x16x19xbf16> to vector<4x16x19xbf16>
    %2 = vector.shape_cast %1 : vector<4x16x19xbf16> to vector<64x19xbf16>
    %c0_3 = arith.constant 0 : index
    %c0_4 = arith.constant 0 : index
    %3 = vector.load %arg3[%c0_3, %c0_4] : memref<19x32xbf16, #tpu.memory_space<vmem>>, vector<19x32xbf16>
    %cst = arith.constant dense<0.000000e+00> : vector<64x32xf32>
    %4 = tpu.matmul %2, %3, %cst {dimension_numbers = #tpu.dot_dimension_numbers<[1], [0], [0], [1], [0, 0, 1, 1], [], []>} : vector<64x19xbf16>, vector<19x32xbf16>, vector<64x32xf32> -> vector<64x32xf32>
    %c0_5 = arith.constant 0 : index
    %c0_6 = arith.constant 0 : index
    %5 = vector.load %arg4[%c0_5, %c0_6] : memref<1x32xf32, #tpu.memory_space<vmem>>, vector<1x32xf32>
    %6 = vector.broadcast %5 : vector<1x32xf32> to vector<64x32xf32>
    %7 = arith.addf %4, %6 : vector<64x32xf32>
    %cst_7 = arith.constant 0.000000e+00 : f32
    %8 = vector.broadcast %cst_7 : f32 to vector<64x32xf32>
    %9 = arith.maximumf %7, %8 : vector<64x32xf32>
    %10 = arith.truncf %9 : vector<64x32xf32> to vector<64x32xbf16>
    %c0_8 = arith.constant 0 : index
    %c0_9 = arith.constant 0 : index
    %c0_10 = arith.constant 0 : index
    %11 = vector.load %arg5[%c0_8, %c0_9, %c0_10] : memref<2x32x32xbf16, #tpu.memory_space<vmem>>, vector<1x32x32xbf16>
    %12 = vector.shape_cast %11 : vector<1x32x32xbf16> to vector<32x32xbf16>
    %cst_11 = arith.constant dense<0.000000e+00> : vector<64x32xf32>
    %13 = tpu.matmul %10, %12, %cst_11 {dimension_numbers = #tpu.dot_dimension_numbers<[1], [0], [0], [1], [0, 0, 1, 1], [], []>} : vector<64x32xbf16>, vector<32x32xbf16>, vector<64x32xf32> -> vector<64x32xf32>
    %c0_12 = arith.constant 0 : index
    %c0_13 = arith.constant 0 : index
    %c0_14 = arith.constant 0 : index
    %14 = vector.load %arg6[%c0_12, %c0_13, %c0_14] : memref<2x1x32xf32, #tpu.memory_space<vmem>>, vector<1x1x32xf32>
    %15 = vector.shape_cast %14 : vector<1x1x32xf32> to vector<1x32xf32>
    %16 = vector.broadcast %15 : vector<1x32xf32> to vector<64x32xf32>
    %17 = arith.addf %13, %16 : vector<64x32xf32>
    %cst_15 = arith.constant 0.000000e+00 : f32
    %18 = vector.broadcast %cst_15 : f32 to vector<64x32xf32>
    %19 = arith.maximumf %17, %18 : vector<64x32xf32>
    %20 = arith.truncf %19 : vector<64x32xf32> to vector<64x32xbf16>
    %c0_16 = arith.constant 0 : index
    %c0_17 = arith.constant 0 : index
    %c0_18 = arith.constant 0 : index
    %21 = vector.load %arg7[%c0_16, %c0_17, %c0_18] : memref<2x32x32xbf16, #tpu.memory_space<vmem>>, vector<1x32x32xbf16>
    %22 = vector.shape_cast %21 : vector<1x32x32xbf16> to vector<32x32xbf16>
    %cst_19 = arith.constant dense<0.000000e+00> : vector<64x32xf32>
    %23 = tpu.matmul %20, %22, %cst_19 {dimension_numbers = #tpu.dot_dimension_numbers<[1], [0], [0], [1], [0, 0, 1, 1], [], []>} : vector<64x32xbf16>, vector<32x32xbf16>, vector<64x32xf32> -> vector<64x32xf32>
    %c0_20 = arith.constant 0 : index
    %c0_21 = arith.constant 0 : index
    %c0_22 = arith.constant 0 : index
    %24 = vector.load %arg8[%c0_20, %c0_21, %c0_22] : memref<2x1x32xf32, #tpu.memory_space<vmem>>, vector<1x1x32xf32>
    %25 = vector.shape_cast %24 : vector<1x1x32xf32> to vector<1x32xf32>
    %26 = vector.broadcast %25 : vector<1x32xf32> to vector<64x32xf32>
    %27 = arith.addf %23, %26 : vector<64x32xf32>
    %28 = arith.addf %27, %9 : vector<64x32xf32>
    %cst_23 = arith.constant 0.000000e+00 : f32
    %29 = vector.broadcast %cst_23 : f32 to vector<64x32xf32>
    %30 = arith.maximumf %28, %29 : vector<64x32xf32>
    %31 = arith.truncf %30 : vector<64x32xf32> to vector<64x32xbf16>
    %c1 = arith.constant 1 : index
    %c0_24 = arith.constant 0 : index
    %c0_25 = arith.constant 0 : index
    %32 = vector.load %arg5[%c1, %c0_24, %c0_25] : memref<2x32x32xbf16, #tpu.memory_space<vmem>>, vector<1x32x32xbf16>
    %33 = vector.shape_cast %32 : vector<1x32x32xbf16> to vector<32x32xbf16>
    %cst_26 = arith.constant dense<0.000000e+00> : vector<64x32xf32>
    %34 = tpu.matmul %31, %33, %cst_26 {dimension_numbers = #tpu.dot_dimension_numbers<[1], [0], [0], [1], [0, 0, 1, 1], [], []>} : vector<64x32xbf16>, vector<32x32xbf16>, vector<64x32xf32> -> vector<64x32xf32>
    %c1_27 = arith.constant 1 : index
    %c0_28 = arith.constant 0 : index
    %c0_29 = arith.constant 0 : index
    %35 = vector.load %arg6[%c1_27, %c0_28, %c0_29] : memref<2x1x32xf32, #tpu.memory_space<vmem>>, vector<1x1x32xf32>
    %36 = vector.shape_cast %35 : vector<1x1x32xf32> to vector<1x32xf32>
    %37 = vector.broadcast %36 : vector<1x32xf32> to vector<64x32xf32>
    %38 = arith.addf %34, %37 : vector<64x32xf32>
    %cst_30 = arith.constant 0.000000e+00 : f32
    %39 = vector.broadcast %cst_30 : f32 to vector<64x32xf32>
    %40 = arith.maximumf %38, %39 : vector<64x32xf32>
    %41 = arith.truncf %40 : vector<64x32xf32> to vector<64x32xbf16>
    %c1_31 = arith.constant 1 : index
    %c0_32 = arith.constant 0 : index
    %c0_33 = arith.constant 0 : index
    %42 = vector.load %arg7[%c1_31, %c0_32, %c0_33] : memref<2x32x32xbf16, #tpu.memory_space<vmem>>, vector<1x32x32xbf16>
    %43 = vector.shape_cast %42 : vector<1x32x32xbf16> to vector<32x32xbf16>
    %cst_34 = arith.constant dense<0.000000e+00> : vector<64x32xf32>
    %44 = tpu.matmul %41, %43, %cst_34 {dimension_numbers = #tpu.dot_dimension_numbers<[1], [0], [0], [1], [0, 0, 1, 1], [], []>} : vector<64x32xbf16>, vector<32x32xbf16>, vector<64x32xf32> -> vector<64x32xf32>
    %c1_35 = arith.constant 1 : index
    %c0_36 = arith.constant 0 : index
    %c0_37 = arith.constant 0 : index
    %45 = vector.load %arg8[%c1_35, %c0_36, %c0_37] : memref<2x1x32xf32, #tpu.memory_space<vmem>>, vector<1x1x32xf32>
    %46 = vector.shape_cast %45 : vector<1x1x32xf32> to vector<1x32xf32>
    %47 = vector.broadcast %46 : vector<1x32xf32> to vector<64x32xf32>
    %48 = arith.addf %44, %47 : vector<64x32xf32>
    %49 = arith.addf %48, %30 : vector<64x32xf32>
    %cst_38 = arith.constant 0.000000e+00 : f32
    %50 = vector.broadcast %cst_38 : f32 to vector<64x32xf32>
    %51 = arith.maximumf %49, %50 : vector<64x32xf32>
    %52 = vector.shape_cast %51 : vector<64x32xf32> to vector<4x16x32xf32>
    %cst_39 = arith.constant dense<0xFF800000> : vector<4x32xf32>
    %53 = vector.multi_reduction <maximumf>, %52, %cst_39 [1] : vector<4x16x32xf32> to vector<4x32xf32>
    %54 = tpu.transpose %53, [1, 0] : vector<4x32xf32> -> vector<32x4xf32>
    %c0_40 = arith.constant 0 : index
    %c0_41 = arith.constant 0 : index
    %c0_42 = arith.constant 0 : index
    %55 = vector.load %arg9[%c0_40, %c0_41, %c0_42] : memref<1x32x4xf32, #tpu.memory_space<vmem>>, vector<1x32x4xf32>
    %56 = vector.shape_cast %55 : vector<1x32x4xf32> to vector<32x4xf32>
    %57 = vector.shape_cast %54 : vector<32x4xf32> to vector<1x32x4xf32>
    tpu.vector_store %arg9[%c0_40, %c0_41, %c0_42], %57 {strides = array<i32>} : memref<1x32x4xf32, #tpu.memory_space<vmem>>, vector<1x32x4xf32>,
    return
  }
  func.func @transform_0(%arg0: i32, %arg1: i32) -> (i32, i32, i32, i32) {
    %c0_i32 = arith.constant 0 : i32
    %c0_i32_0 = arith.constant 0 : i32
    %c0_i32_1 = arith.constant 0 : i32
    return %arg0, %arg1, %c0_i32, %c0_i32_0 : i32, i32, i32, i32
  }
  func.func @transform_1(%arg0: i32, %arg1: i32) -> (i32, i32) {
    %c0_i32 = arith.constant 0 : i32
    %c0_i32_0 = arith.constant 0 : i32
    %c0_i32_1 = arith.constant 0 : i32
    return %c0_i32, %c0_i32_0 : i32, i32
  }
  func.func @transform_2(%arg0: i32, %arg1: i32) -> (i32, i32) {
    %c0_i32 = arith.constant 0 : i32
    %c0_i32_0 = arith.constant 0 : i32
    %c0_i32_1 = arith.constant 0 : i32
    return %c0_i32, %c0_i32_0 : i32, i32
  }
  func.func @transform_3(%arg0: i32, %arg1: i32) -> (i32, i32, i32) {
    %c0_i32 = arith.constant 0 : i32
    %c0_i32_0 = arith.constant 0 : i32
    %c0_i32_1 = arith.constant 0 : i32
    %c0_i32_2 = arith.constant 0 : i32
    return %c0_i32, %c0_i32_0, %c0_i32_1 : i32, i32, i32
  }
  func.func @transform_4(%arg0: i32, %arg1: i32) -> (i32, i32, i32) {
    %c0_i32 = arith.constant 0 : i32
    %c0_i32_0 = arith.constant 0 : i32
    %c0_i32_1 = arith.constant 0 : i32
    %c0_i32_2 = arith.constant 0 : i32
    return %c0_i32, %c0_i32_0, %c0_i32_1 : i32, i32, i32
  }
  func.func @transform_5(%arg0: i32, %arg1: i32) -> (i32, i32, i32) {
    %c0_i32 = arith.constant 0 : i32
    %c0_i32_0 = arith.constant 0 : i32
    %c0_i32_1 = arith.constant 0 : i32
    %c0_i32_2 = arith.constant 0 : i32
    return %c0_i32, %c0_i32_0, %c0_i32_1 : i32, i32, i32
  }
  func.func @transform_6(%arg0: i32, %arg1: i32) -> (i32, i32, i32) {
    %c0_i32 = arith.constant 0 : i32
    %c0_i32_0 = arith.constant 0 : i32
    %c0_i32_1 = arith.constant 0 : i32
    %c0_i32_2 = arith.constant 0 : i32
    return %c0_i32, %c0_i32_0, %c0_i32_1 : i32, i32, i32
  }
  func.func @transform_7(%arg0: i32, %arg1: i32) -> (i32, i32, i32) {
    %c0_i32 = arith.constant 0 : i32
    %c0_i32_0 = arith.constant 0 : i32
    return %arg0, %c0_i32, %arg1 : i32, i32, i32
  }
}

</mosaic_0001>

<llo_original>
// kernel: tpu_custom_call.1
$region0: #{tpu_custom_call.1}
  #allocation0 [shape = 'u32[]', space=smem, size = 0x4, offset = 0x4, fixed_abs, tag = 'smem constant byte address 0x4 - core index']
  #allocation1 [shape = 'u32[144,128]{1,0:T(1,128)}', space=vmem, size = 0x12000, scoped, tag = 'internal scratch']
  %s0 = inlined_call_operand.hbm [shape: bf16[2,4,16,19], index: 0, kind: input, shape index: {}]
  %s1 = inlined_call_operand.hbm [shape: bf16[19,32], index: 1, kind: input, shape index: {}]
  %s2 = inlined_call_operand.vmem [shape: f32[1,32], index: 2, kind: input, shape index: {}]
  %s3 = inlined_call_operand.hbm [shape: bf16[2,32,32], index: 3, kind: input, shape index: {}]
  %s4 = inlined_call_operand.vmem [shape: f32[2,1,32], index: 4, kind: input, shape index: {}]
  %s5 = inlined_call_operand.hbm [shape: bf16[2,32,32], index: 5, kind: input, shape index: {}]
  %s6 = inlined_call_operand.vmem [shape: f32[2,1,32], index: 6, kind: input, shape index: {}]
  %s7 = inlined_call_operand.vmem [shape: f32[2,32,4], index: 7, kind: output, shape index: {}]
  %s8 = sld [smem:[#allocation0]]
  $region77: #{tpu_custom_call.1} parent=0
    _
  %s10 = ssub.s32 1, %s8
  %s11 = scalar_select 0, %s10, %s8
  $region1: #{tpu_custom_call.1} parent=0
    #allocation2 [shape = 'u8[32768]{0}', space=vmem, size = 0x8000, scoped, tag = 'input window, operand 0']
    #allocation3 [shape = 's32[2]{0}', space=sflag, size = 0x8, scoped, tag = 'scoped memory for tpu_custom_call.1']
    #allocation4 [shape = 'u8[6144]{0}', space=vmem, size = 0x1800, scoped, tag = 'input window, operand 1, single buffered']
    #allocation5 [shape = 's32[1]{0}', space=sflag, size = 0x4, scoped, tag = 'scoped memory for tpu_custom_call.1']
    #allocation6 [shape = 'u8[16384]{0}', space=vmem, size = 0x4000, scoped, tag = 'input window, operand 3, single buffered']
    #allocation7 [shape = 'u8[16384]{0}', space=vmem, size = 0x4000, scoped, tag = 'input window, operand 5, single buffered']
    #allocation8 [shape = 's32[1]{0}', space=sflag, size = 0x4, scoped, tag = 'scoped memory for tpu_custom_call.1']
    %12 = vsyncpa [#allocation3], 0
    %s13 = scalar_lea.sflag [#allocation3], 1
    %14 = vsyncpa %s13, 0
    %15 = vsyncpa [#allocation5], 0
    %16 = vsyncpa [#allocation8], 0
    loop: start=0, step=1, limit=4
    $region2: #{tpu_custom_call.1} parent=1 // loop_pre_header
      _
    $region3: #{tpu_custom_call.1} parent=1 // loop_header
      %s18 = sphi 0, %s22
      %p19 = scmp.ge.s32.totalorder %s18, 4
      %s25 = sphi 0, %s37
      %s26 = sphi 0, %s33
      %s27 = sphi 0, %s25
      %s28 = sphi 0, %s26
      %s29 = sphi 0, %s27
      %s30 = sphi 0, %s28
      %s42 = sphi 0, %s44
      %s45 = sphi 0, %s42
      %s46 = sphi 0, %s45
      %s62 = sphi 0, %s46
      %s66 = sphi 0, %s66
      %s68 = sphi 0, %s66
      %s69 = sphi 0, %s68
      %s83 = sphi 0, %s69
      %s87 = sphi 0, %s87
      %s89 = sphi 0, %s87
      %s90 = sphi 0, %s89
      %s104 = sphi 0, %s90
      %s108 = sphi 0, %s108
      %s110 = sphi 0, %s108
      %s111 = sphi 0, %s110
      %s125 = sphi 0, %s111
      %s129 = sphi 0, %s129
      %s131 = sphi 0, %s129
      %s132 = sphi 0, %s131
      %s146 = sphi 0, %s132
      %s150 = sphi 0, %s150
      %s152 = sphi 0, %s150
      %s153 = sphi 0, %s152
      %s167 = sphi 0, %s153
      %s171 = sphi 0, %s171
      %s173 = sphi 0, %s171
      %s174 = sphi 0, %s173
      %s188 = sphi 0, %s174
      %s196 = sphi 0, %s198
      %s199 = sphi 0, %s196
      %s200 = sphi 0, %s199
      %s216 = sphi 0, %s200
    $region4: #{tpu_custom_call.1} parent=1 // loop_header_branch
      %21 = sbr.rel (%p19) target = $region8
    $region5: #{tpu_custom_call.1} parent=1 // loop_body
      %s23 = ssub.s32 %s18, 1
      %s24 = ssub.s32 %s18, 2
      %s31 = sadd.s32 1, %s26
      %p32 = scmp.ge.s32.totalorder %s31, 1
      %s33 = scalar_select %p32, 0, %s31
      %s34 = sadd.s32 1, %s25
      %s35 = scalar_select %p32, %s34, %s25
      %p36 = scmp.ge.s32.totalorder %s35, 2
      %s37 = scalar_select %p36, 0, %s35
      %s38 = ssub.s32 %s25, %s37
      %s39 = ssub.s32 %s26, %s33
      %s40 = sor.u32 %s38, %s39
      %p41 = scmp.eq.s32.totalorder %s40, 0
      %s43 = sadd.s32 %s42, 1
      %s44 = scalar_select %p41, %s42, %s43
      %p47 = pneg %p41
      %p48 = scmp.eq.s32.totalorder %s18, 1
      %p49 = por %p47, %p48
      %p50 = scmp.ne.s32.totalorder %s42, %s45
      %p51 = scmp.eq.s32.totalorder %s18, 0
      %p52 = por %p50, %p51
      %p53 = scmp.ne.s32.totalorder %s42, %s45
      %p54 = scmp.eq.s32.totalorder %s23, 1
      %p55 = por %p53, %p54
      %p56 = scmp.ne.s32.totalorder %s45, %s46
      %p57 = scmp.eq.s32.totalorder %s23, 0
      %p58 = por %p56, %p57
      %p59 = scmp.ne.s32.totalorder %s45, %s46
      %p60 = scmp.eq.s32.totalorder %s24, 1
      %p61 = por %p59, %p60
      %p63 = scmp.ne.s32.totalorder %s46, %s62
      %p64 = scmp.eq.s32.totalorder %s24, 0
      %p65 = por %p63, %p64
      %s67 = sadd.s32 %s66, 1
      %p70 = scmp.eq.s32.totalorder %s18, 1
      %p71 = scmp.ne.s32.totalorder %s66, %s68
      %p72 = scmp.eq.s32.totalorder %s18, 0
      %p73 = por %p71, %p72
      %p74 = scmp.ne.s32.totalorder %s66, %s68
      %p75 = scmp.eq.s32.totalorder %s23, 1
      %p76 = por %p74, %p75
      %p77 = scmp.ne.s32.totalorder %s68, %s69
      %p78 = scmp.eq.s32.totalorder %s23, 0
      %p79 = por %p77, %p78
      %p80 = scmp.ne.s32.totalorder %s68, %s69
      %p81 = scmp.eq.s32.totalorder %s24, 1
      %p82 = por %p80, %p81
      %p84 = scmp.ne.s32.totalorder %s69, %s83
      %p85 = scmp.eq.s32.totalorder %s24, 0
      %p86 = por %p84, %p85
      %s88 = sadd.s32 %s87, 1
      %p91 = scmp.eq.s32.totalorder %s18, 1
      %p92 = scmp.ne.s32.totalorder %s87, %s89
      %p93 = scmp.eq.s32.totalorder %s18, 0
      %p94 = por %p92, %p93
      %p95 = scmp.ne.s32.totalorder %s87, %s89
      %p96 = scmp.eq.s32.totalorder %s23, 1
      %p97 = por %p95, %p96
      %p98 = scmp.ne.s32.totalorder %s89, %s90
      %p99 = scmp.eq.s32.totalorder %s23, 0
      %p100 = por %p98, %p99
      %p101 = scmp.ne.s32.totalorder %s89, %s90
      %p102 = scmp.eq.s32.totalorder %s24, 1
      %p103 = por %p101, %p102
      %p105 = scmp.ne.s32.totalorder %s90, %s104
      %p106 = scmp.eq.s32.totalorder %s24, 0
      %p107 = por %p105, %p106
      %s109 = sadd.s32 %s108, 1
      %p112 = scmp.eq.s32.totalorder %s18, 1
      %p113 = scmp.ne.s32.totalorder %s108, %s110
      %p114 = scmp.eq.s32.totalorder %s18, 0
      %p115 = por %p113, %p114
      %p116 = scmp.ne.s32.totalorder %s108, %s110
      %p117 = scmp.eq.s32.totalorder %s23, 1
      %p118 = por %p116, %p117
      %p119 = scmp.ne.s32.totalorder %s110, %s111
      %p120 = scmp.eq.s32.totalorder %s23, 0
      %p121 = por %p119, %p120
      %p122 = scmp.ne.s32.totalorder %s110, %s111
      %p123 = scmp.eq.s32.totalorder %s24, 1
      %p124 = por %p122, %p123
      %p126 = scmp.ne.s32.totalorder %s111, %s125
      %p127 = scmp.eq.s32.totalorder %s24, 0
      %p128 = por %p126, %p127
      %s130 = sadd.s32 %s129, 1
      %p133 = scmp.eq.s32.totalorder %s18, 1
      %p134 = scmp.ne.s32.totalorder %s129, %s131
      %p135 = scmp.eq.s32.totalorder %s18, 0
      %p136 = por %p134, %p135
      %p137 = scmp.ne.s32.totalorder %s129, %s131
      %p138 = scmp.eq.s32.totalorder %s23, 1
      %p139 = por %p137, %p138
      %p140 = scmp.ne.s32.totalorder %s131, %s132
      %p141 = scmp.eq.s32.totalorder %s23, 0
      %p142 = por %p140, %p141
      %p143 = scmp.ne.s32.totalorder %s131, %s132
      %p144 = scmp.eq.s32.totalorder %s24, 1
      %p145 = por %p143, %p144
      %p147 = scmp.ne.s32.totalorder %s132, %s146
      %p148 = scmp.eq.s32.totalorder %s24, 0
      %p149 = por %p147, %p148
      %s151 = sadd.s32 %s150, 1
      %p154 = scmp.eq.s32.totalorder %s18, 1
      %p155 = scmp.ne.s32.totalorder %s150, %s152
      %p156 = scmp.eq.s32.totalorder %s18, 0
      %p157 = por %p155, %p156
      %p158 = scmp.ne.s32.totalorder %s150, %s152
      %p159 = scmp.eq.s32.totalorder %s23, 1
      %p160 = por %p158, %p159
      %p161 = scmp.ne.s32.totalorder %s152, %s153
      %p162 = scmp.eq.s32.totalorder %s23, 0
      %p163 = por %p161, %p162
      %p164 = scmp.ne.s32.totalorder %s152, %s153
      %p165 = scmp.eq.s32.totalorder %s24, 1
      %p166 = por %p164, %p165
      %p168 = scmp.ne.s32.totalorder %s153, %s167
      %p169 = scmp.eq.s32.totalorder %s24, 0
      %p170 = por %p168, %p169
      %s172 = sadd.s32 %s171, 1
      %p175 = scmp.eq.s32.totalorder %s18, 1
      %p176 = scmp.ne.s32.totalorder %s171, %s173
      %p177 = scmp.eq.s32.totalorder %s18, 0
      %p178 = por %p176, %p177
      %p179 = scmp.ne.s32.totalorder %s171, %s173
      %p180 = scmp.eq.s32.totalorder %s23, 1
      %p181 = por %p179, %p180
      %p182 = scmp.ne.s32.totalorder %s173, %s174
      %p183 = scmp.eq.s32.totalorder %s23, 0
      %p184 = por %p182, %p183
      %p185 = scmp.ne.s32.totalorder %s173, %s174
      %p186 = scmp.eq.s32.totalorder %s24, 1
      %p187 = por %p185, %p186
      %p189 = scmp.ne.s32.totalorder %s174, %s188
      %p190 = scmp.eq.s32.totalorder %s24, 0
      %p191 = por %p189, %p190
      %s192 = ssub.s32 %s25, %s37
      %s193 = ssub.s32 %s26, %s33
      %s194 = sor.u32 %s192, %s193
      %p195 = scmp.eq.s32.totalorder %s194, 0
      %s197 = sadd.s32 %s196, 1
      %s198 = scalar_select %p195, %s196, %s197
      %p201 = pneg %p195
      %p202 = scmp.eq.s32.totalorder %s18, 1
      %p203 = por %p201, %p202
      %p204 = scmp.ne.s32.totalorder %s196, %s199
      %p205 = scmp.eq.s32.totalorder %s18, 0
      %p206 = por %p204, %p205
      %p207 = scmp.ne.s32.totalorder %s196, %s199
      %p208 = scmp.eq.s32.totalorder %s23, 1
      %p209 = por %p207, %p208
      %p210 = scmp.ne.s32.totalorder %s199, %s200
      %p211 = scmp.eq.s32.totalorder %s23, 0
      %p212 = por %p210, %p211
      %p213 = scmp.ne.s32.totalorder %s199, %s200
      %p214 = scmp.eq.s32.totalorder %s24, 1
      %p215 = por %p213, %p214
      %p217 = scmp.ne.s32.totalorder %s200, %s216
      %p218 = scmp.eq.s32.totalorder %s24, 0
      %p219 = por %p217, %p218
      %p220 = scmp.le.s32.totalorder 1, %s18
      %p221 = scmp.lt.s32.totalorder %s18, 3
      %p222 = pnand %p220, %p221
      %p223 = pneg %p222
      // Predicated region
      $region9: #{tpu_custom_call.1} parent=5 // pred_check
        _
      $region10: #{tpu_custom_call.1} parent=5 // pred_check_branch
        %225 = sbr.rel (%p222) target = $region12
      $region11: #{tpu_custom_call.1} parent=5 // pred_region
        %s226 = ssub.s32 %s18, 1
        // Predicated region
        $region13: #{tpu_custom_call.1} parent=11 // pred_check
          %p227 = pneg %p79
        $region14: #{tpu_custom_call.1} parent=11 // pred_check_branch
          %229 = sbr.rel (%p227) target = $region16
        $region15: #{tpu_custom_call.1} parent=11 // pred_region
          %s231 = ssub.s32 192, 192
          %232 = vsyncadd [#allocation5], %s231
          %s233 = sshll.u32 [#allocation4], 4
          %s234 = int_to_ptr.vmem [resolvable:$true] %s233
          %239 = dma.hbm_to_vmem [thread:$0]  %s1, 192, %s234, [#allocation5], 64, 64, 4
        $region16: #{tpu_custom_call.1} parent=11 // pred_fallthru
          _
        // Predicated region
        $region17: #{tpu_custom_call.1} parent=11 // pred_check
          %p240 = pneg %p100
        $region18: #{tpu_custom_call.1} parent=11 // pred_check_branch
          %242 = sbr.rel (%p240) target = $region20
        $region19: #{tpu_custom_call.1} parent=11 // pred_region
          _
        $region20: #{tpu_custom_call.1} parent=11 // pred_fallthru
          _
        // Predicated region
        $region21: #{tpu_custom_call.1} parent=11 // pred_check
          %p243 = pneg %p121
        $region22: #{tpu_custom_call.1} parent=11 // pred_check_branch
          %245 = sbr.rel (%p243) target = $region24
        $region23: #{tpu_custom_call.1} parent=11 // pred_region
          %s247 = ssub.s32 512, 512
          %248 = vsyncadd [#allocation5], %s247
          %s249 = sshll.u32 [#allocation6], 4
          %s250 = int_to_ptr.vmem [resolvable:$true] %s249
          %255 = dma.hbm_to_vmem [thread:$0]  %s3, 512, %s250, [#allocation5], 64, 64, 4
        $region24: #{tpu_custom_call.1} parent=11 // pred_fallthru
          _
        // Predicated region
        $region25: #{tpu_custom_call.1} parent=11 // pred_check
          %p256 = pneg %p142
        $region26: #{tpu_custom_call.1} parent=11 // pred_check_branch
          %258 = sbr.rel (%p256) target = $region28
        $region27: #{tpu_custom_call.1} parent=11 // pred_region
          _
        $region28: #{tpu_custom_call.1} parent=11 // pred_fallthru
          _
        // Predicated region
        $region29: #{tpu_custom_call.1} parent=11 // pred_check
          %p259 = pneg %p163
        $region30: #{tpu_custom_call.1} parent=11 // pred_check_branch
          %261 = sbr.rel (%p259) target = $region32
        $region31: #{tpu_custom_call.1} parent=11 // pred_region
          %s263 = ssub.s32 512, 512
          %264 = vsyncadd [#allocation8], %s263
          %s265 = sshll.u32 [#allocation7], 4
          %s266 = int_to_ptr.vmem [resolvable:$true] %s265
          %271 = dma.hbm_to_vmem [thread:$0]  %s5, 512, %s266, [#allocation8], 64, 64, 4
        $region32: #{tpu_custom_call.1} parent=11 // pred_fallthru
          _
        // Predicated region
        $region33: #{tpu_custom_call.1} parent=11 // pred_check
          %p272 = pneg %p184
        $region34: #{tpu_custom_call.1} parent=11 // pred_check_branch
          %274 = sbr.rel (%p272) target = $region36
        $region35: #{tpu_custom_call.1} parent=11 // pred_region
          _
        $region36: #{tpu_custom_call.1} parent=11 // pred_fallthru
          _
      $region12: #{tpu_custom_call.1} parent=5 // pred_fallthru
        _
      %p275 = scmp.lt.s32.totalorder %s18, 2
      // Predicated region
      $region37: #{tpu_custom_call.1} parent=5 // pred_check
        %p276 = pneg %p275
      $region38: #{tpu_custom_call.1} parent=5 // pred_check_branch
        %278 = sbr.rel (%p276) target = $region40
      $region39: #{tpu_custom_call.1} parent=5 // pred_region
        // Predicated region
        $region41: #{tpu_custom_call.1} parent=39 // pred_check
          %p279 = pneg %p52
        $region42: #{tpu_custom_call.1} parent=39 // pred_check_branch
          %281 = sbr.rel (%p279) target = $region44
        $region43: #{tpu_custom_call.1} parent=39 // pred_region
          %s282 = sand.u32 %s42, 1
          %s283 = scalar_lea.sflag [#allocation3], %s282
          %s284 = sand.u32 %s42, 1
          %s285 = smul.addr %s284, 32
          %s286 = scalar_lea.vmem [#allocation2], %s285
          %s287 = smul.u32 4, %s26
          %s289 = ssub.s32 512, 512
          %290 = vsyncadd %s283, %s289
          %s291 = smul.addr %s287, 2
          %s292 = smul.addr %s25, 8
          %s293 = sadd.s32 %s291, %s292
          %s294 = smul.addr %s293, 64
          %s295 = scalar_lea.hbm %s0, %s294
          %s296 = sshll.u32 %s286, 4
          %s297 = int_to_ptr.vmem [resolvable:$true] %s296
          %302 = dma.hbm_to_vmem [thread:$0]  %s295, 512, %s297, %s283, 64, 64, 4
        $region44: #{tpu_custom_call.1} parent=39 // pred_fallthru
          _
      $region40: #{tpu_custom_call.1} parent=5 // pred_fallthru
        _
      %p303 = scmp.le.s32.totalorder 1, %s18
      %p304 = scmp.lt.s32.totalorder %s18, 3
      %p305 = pnand %p303, %p304
      %p306 = pneg %p305
      // Predicated region
      $region45: #{tpu_custom_call.1} parent=5 // pred_check
        _
      $region46: #{tpu_custom_call.1} parent=5 // pred_check_branch
        %308 = sbr.rel (%p305) target = $region48
      $region47: #{tpu_custom_call.1} parent=5 // pred_region
        %s309 = ssub.s32 %s18, 1
        %s310 = sand.u32 %s45, 1
        %s311 = scalar_lea.sflag [#allocation3], %s310
        %s312 = sand.u32 %s45, 1
        %s313 = smul.addr %s312, 32
        %s314 = scalar_lea.vmem [#allocation2], %s313
        // Predicated region
        $region49: #{tpu_custom_call.1} parent=47 // pred_check
          %p315 = pneg %p58
        $region50: #{tpu_custom_call.1} parent=47 // pred_check_branch
          %317 = sbr.rel (%p315) target = $region52
        $region51: #{tpu_custom_call.1} parent=47 // pred_region
          %318 = dma.done %s311, 512
        $region52: #{tpu_custom_call.1} parent=47 // pred_fallthru
          _
        // Predicated region
        $region53: #{tpu_custom_call.1} parent=47 // pred_check
          %p319 = pneg %p79
        $region54: #{tpu_custom_call.1} parent=47 // pred_check_branch
          %321 = sbr.rel (%p319) target = $region56
        $region55: #{tpu_custom_call.1} parent=47 // pred_region
          %322 = dma.done [#allocation5], 192
        $region56: #{tpu_custom_call.1} parent=47 // pred_fallthru
          _
        // Predicated region
        $region57: #{tpu_custom_call.1} parent=47 // pred_check
          %p323 = pneg %p121
        $region58: #{tpu_custom_call.1} parent=47 // pred_check_branch
          %325 = sbr.rel (%p323) target = $region60
        $region59: #{tpu_custom_call.1} parent=47 // pred_region
          %326 = dma.done [#allocation5], 512
        $region60: #{tpu_custom_call.1} parent=47 // pred_fallthru
          _
        // Predicated region
        $region61: #{tpu_custom_call.1} parent=47 // pred_check
          %p327 = pneg %p163
        $region62: #{tpu_custom_call.1} parent=47 // pred_check_branch
          %329 = sbr.rel (%p327) target = $region64
        $region63: #{tpu_custom_call.1} parent=47 // pred_region
          %330 = dma.done [#allocation8], 512
        $region64: #{tpu_custom_call.1} parent=47 // pred_fallthru
          _
        %s331 = sand.u32 %s45, 1
        %s332 = scalar_lea.sflag [#allocation3], %s331
        %s333 = sand.u32 %s45, 1
        %s334 = smul.addr %s333, 32
        %s335 = scalar_lea.vmem [#allocation2], %s334
        %p336 = pneg %p58
        %p337 = pneg %p55
        %p338 = pneg %p79
        %p339 = pneg %p76
        %p340 = pneg %p100
        %p341 = pneg %p97
        %p342 = pneg %p121
        %p343 = pneg %p118
        %p344 = pneg %p142
        %p345 = pneg %p139
        %p346 = pneg %p163
        %p347 = pneg %p160
        %p348 = pneg %p184
        %p349 = pneg %p181
        %p350 = pneg %p212
        %p351 = pneg %p209
        %p352 = scmp.lt.s32.totalorder %s27, 1
        %s353 = scalar_select %p352, %s27, 1
        %p354 = scmp.lt.s32.totalorder %s28, 0
        %s355 = scalar_select %p354, %s28, 0
        %s356 = smul.addr %s353, 4
        %s357 = sadd.s32 %s355, %s356
        %s358 = smul.addr %s357, 8
        %s359 = scalar_lea.vmem %s7, %s358
        %s360 = smul.u32 4, %s28
        %p361 = scmp.lt.s32.totalorder %s27, 1
        %s362 = scalar_select %p361, %s27, 1
        %p363 = scmp.lt.s32.totalorder %s28, 0
        %s364 = scalar_select %p363, %s28, 0
        %s365 = smul.addr %s362, 4
        %s366 = sadd.s32 %s364, %s365
        %s367 = smul.addr %s366, 8
        %s368 = scalar_lea.vmem %s7, %s367
        %v370 = vld [vmem:[%s314] sm:$0xf]
        %v371 = vld [vmem:[%s314 + $0x4] sm:$0xf]
        %v372 = vld [vmem:[%s314 + $0x8] sm:$0xf]
        %v373 = vld [vmem:[%s314 + $0xc] sm:$0xf]
        %v374 = vld [vmem:[%s314 + $0x10] sm:$0xf]
        %v375 = vld [vmem:[%s314 + $0x14] sm:$0xf]
        %v376 = vld [vmem:[%s314 + $0x18] sm:$0xf]
        %v377 = vld [vmem:[%s314 + $0x1c] sm:$0xf]
        %v378 = vld [vmem:[#allocation4] sm:$0xf]
        %v379 = vld [vmem:[#allocation4 + $0x4] sm:$0xf]
        %v380 = vld [vmem:[#allocation4 + $0x8] sm:$0x3]
        %v381 = vld [vmem:[%s2] sm:$0x1]
        %v383 = vlaneseq
        %v384 = vshrl.u32 %v383, 7
        %v385 = vsub.s32 0, %v384
        %v386 = vrot.slane %v381, %v385
        %v396 = vunpack.c.l.b16 %v370
        %v397 = vunpack.c.l.b16 %v371
        %v398 = vunpack.c.l.b16 %v372
        %v399 = vunpack.c.l.b16 %v373
        %v400 = vunpack.c.l.b16 %v374
        %v401 = vunpack.c.l.b16 %v375
        %v402 = vunpack.c.l.b16 %v376
        %v403 = vunpack.c.l.b16 %v377
        %v404 = vpack.c.b16 %v397, %v396
        %v405 = vpack.c.b16 %v399, %v398
        %v406 = vpack.c.b16 %v401, %v400
        %v407 = vpack.c.b16 %v403, %v402
        %v411 = vunpack.c.l.b16 %v378
        %v412 = vunpack.c.l.b16 %v379
        %v413 = vunpack.c.l.b16 %v380
        %v414 = vpack.c.b16 %v412, %v411
        %v415 = vpack.c.b16 %v413, %v413
        %vm417 = vcmask 154624
        %v419 = vsel %vm417, %v404, 0
        %v422 = vsel %vm417, %v405, 0
        %v425 = vsel %vm417, %v406, 0
        %v428 = vsel %vm417, %v407, 0
        %vm430 = vcmask 1040384
        %vm431 = vcmask 1041408
        %v432 = vsel %vm430, 4294967295, 65535
        %v433 = vsel %vm431, %v432, 0
        %v435 = vand.u32 %v415, %v433
        %437 = vmatprep.subr.bf16.mxu0 0
        %438 = vmatpush1.bf16.msra.mxu0 0
        %439 = vmatprep.subr.bf16.mxu0 0
        %440 = vmatpush1.bf16.msra.mxu0 0
        %441 = vmatprep.subr.bf16.mxu0 0
        %442 = vmatpush1.bf16.msra.mxu0 0
        %443 = vmatprep.subr.bf16.mxu0 0
        %444 = vmatpush1.bf16.msra.mxu0 0
        %445 = vmatprep.subr.bf16.mxu0 0
        %446 = vmatpush1.bf16.msra.mxu0 0
        %447 = vmatprep.subr.bf16.mxu0 0
        %448 = vmatpush1.bf16.msra.mxu0 0
        %449 = vmatprep.subr.bf16.mxu0 0
        %450 = vmatpush1.bf16.msra.mxu0 %v435
        %451 = vmatprep.subr.bf16.mxu0 0
        %452 = vmatpush1.bf16.msra.mxu0 %v414
        %453 = vmatprep.subr.bf16.mxu0 0
        %454 = vmatpush2.bf16.msra.mxu0 0
        %455 = vmatprep.subr.bf16.mxu0 0
        %456 = vmatpush2.bf16.msra.mxu0 0
        %457 = vmatprep.subr.bf16.mxu0 0
        %458 = vmatpush2.bf16.msra.mxu0 0
        %459 = vmatprep.subr.bf16.mxu0 0
        %460 = vmatpush2.bf16.msra.mxu0 0
        %461 = vmatprep.subr.bf16.mxu0 0
        %462 = vmatpush2.bf16.msra.mxu0 0
        %463 = vmatprep.subr.bf16.mxu0 0
        %464 = vmatpush2.bf16.msra.mxu0 0
        %465 = vmatprep.subr.bf16.mxu0 0
        %466 = vmatpush2.bf16.msra.mxu0 0
        %467 = vmatprep.subr.bf16.mxu0 0
        %468 = vmatpush2.bf16.msra.mxu0 0
        %469 = vmatprep.mubr.bf16.mxu0 0
        %470 = vmatmul.mubr.bf16.gmra.mxu0 %v419
        %v471 = vpop.f32.mrf.mxu0
        %v472 = vadd.f32 %v386, %v471
        %v473 = vpop.f32.mrf.mxu0
        %v474 = vpop.f32.mrf.mxu0
        %v475 = vadd.f32 %v386, %v474
        %v476 = vpop.f32.mrf.mxu0
        %477 = vmatprep.mubr.bf16.mxu0 0
        %478 = vmatmul.mubr.bf16.gmra.mxu0 %v422
        %v479 = vpop.f32.mrf.mxu0
        %v480 = vadd.f32 %v386, %v479
        %v481 = vpop.f32.mrf.mxu0
        %v482 = vpop.f32.mrf.mxu0
        %v483 = vadd.f32 %v386, %v482
        %v484 = vpop.f32.mrf.mxu0
        %485 = vmatprep.mubr.bf16.mxu0 0
        %486 = vmatmul.mubr.bf16.gmra.mxu0 %v425
        %v487 = vpop.f32.mrf.mxu0
        %v488 = vadd.f32 %v386, %v487
        %v489 = vpop.f32.mrf.mxu0
        %v490 = vpop.f32.mrf.mxu0
        %v491 = vadd.f32 %v386, %v490
        %v492 = vpop.f32.mrf.mxu0
        %493 = vmatprep.mubr.bf16.mxu0 0
        %494 = vmatmul.mubr.bf16.gmra.mxu0 %v428
        %v495 = vpop.f32.mrf.mxu0
        %v496 = vadd.f32 %v386, %v495
        %v497 = vpop.f32.mrf.mxu0
        %v498 = vpop.f32.mrf.mxu0
        %v499 = vadd.f32 %v386, %v498
        %v500 = vpop.f32.mrf.mxu0
        %501 = vdwg.mxu0
        %v502 = vmax.f32 %v472, 0.0
        %v503 = vmax.f32 %v475, 0.0
        %v504 = vmax.f32 %v480, 0.0
        %v505 = vmax.f32 %v483, 0.0
        %v506 = vmax.f32 %v488, 0.0
        %v507 = vmax.f32 %v491, 0.0
        %v508 = vmax.f32 %v496, 0.0
        %v509 = vmax.f32 %v499, 0.0
        %v510 = vpack.c.bf16 %v503, %v502
        %v511 = vpack.c.bf16 %v505, %v504
        %v512 = vpack.c.bf16 %v507, %v506
        %v513 = vpack.c.bf16 %v509, %v508
        %v514 = vld [vmem:[#allocation6] sm:$0xf]
        %v515 = vld [vmem:[#allocation6 + $0x4] sm:$0xf]
        %v516 = vld [vmem:[#allocation6 + $0x8] sm:$0xf]
        %v517 = vld [vmem:[#allocation6 + $0xc] sm:$0xf]
        %v518 = vld [vmem:[%s4] sm:$0x1]
        %v520 = vlaneseq
        %v521 = vshrl.u32 %v520, 7
        %v522 = vsub.s32 0, %v521
        %v523 = vrot.slane %v518, %v522
        %v529 = vunpack.c.l.b16 %v514
        %v530 = vunpack.c.l.b16 %v515
        %v531 = vunpack.c.l.b16 %v516
        %v532 = vunpack.c.l.b16 %v517
        %v533 = vpack.c.b16 %v530, %v529
        %v534 = vpack.c.b16 %v532, %v531
        %vm537 = vcmask 261120
        %v539 = vsel %vm537, %v510, 0
        %v542 = vsel %vm537, %v511, 0
        %v545 = vsel %vm537, %v512, 0
        %v548 = vsel %vm537, %v513, 0
        %550 = vmatprep.subr.bf16.mxu0 0
        %551 = vmatpush1.bf16.msra.mxu0 0
        %552 = vmatprep.subr.bf16.mxu0 0
        %553 = vmatpush1.bf16.msra.mxu0 0
        %554 = vmatprep.subr.bf16.mxu0 0
        %555 = vmatpush1.bf16.msra.mxu0 0
        %556 = vmatprep.subr.bf16.mxu0 0
        %557 = vmatpush1.bf16.msra.mxu0 0
        %558 = vmatprep.subr.bf16.mxu0 0
        %559 = vmatpush1.bf16.msra.mxu0 0
        %560 = vmatprep.subr.bf16.mxu0 0
        %561 = vmatpush1.bf16.msra.mxu0 0
        %562 = vmatprep.subr.bf16.mxu0 0
        %563 = vmatpush1.bf16.msra.mxu0 %v534
        %564 = vmatprep.subr.bf16.mxu0 0
        %565 = vmatpush1.bf16.msra.mxu0 %v533
        %566 = vmatprep.subr.bf16.mxu0 0
        %567 = vmatpush2.bf16.msra.mxu0 0
        %568 = vmatprep.subr.bf16.mxu0 0
        %569 = vmatpush2.bf16.msra.mxu0 0
        %570 = vmatprep.subr.bf16.mxu0 0
        %571 = vmatpush2.bf16.msra.mxu0 0
        %572 = vmatprep.subr.bf16.mxu0 0
        %573 = vmatpush2.bf16.msra.mxu0 0
        %574 = vmatprep.subr.bf16.mxu0 0
        %575 = vmatpush2.bf16.msra.mxu0 0
        %576 = vmatprep.subr.bf16.mxu0 0
        %577 = vmatpush2.bf16.msra.mxu0 0
        %578 = vmatprep.subr.bf16.mxu0 0
        %579 = vmatpush2.bf16.msra.mxu0 0
        %580 = vmatprep.subr.bf16.mxu0 0
        %581 = vmatpush2.bf16.msra.mxu0 0
        %582 = vmatprep.mubr.bf16.mxu0 0
        %583 = vmatmul.mubr.bf16.gmra.mxu0 %v539
        %v584 = vpop.f32.mrf.mxu0
        %v585 = vadd.f32 %v523, %v584
        %v586 = vpop.f32.mrf.mxu0
        %v587 = vpop.f32.mrf.mxu0
        %v588 = vadd.f32 %v523, %v587
        %v589 = vpop.f32.mrf.mxu0
        %590 = vmatprep.mubr.bf16.mxu0 0
        %591 = vmatmul.mubr.bf16.gmra.mxu0 %v542
        %v592 = vpop.f32.mrf.mxu0
        %v593 = vadd.f32 %v523, %v592
        %v594 = vpop.f32.mrf.mxu0
        %v595 = vpop.f32.mrf.mxu0
        %v596 = vadd.f32 %v523, %v595
        %v597 = vpop.f32.mrf.mxu0
        %598 = vmatprep.mubr.bf16.mxu0 0
        %599 = vmatmul.mubr.bf16.gmra.mxu0 %v545
        %v600 = vpop.f32.mrf.mxu0
        %v601 = vadd.f32 %v523, %v600
        %v602 = vpop.f32.mrf.mxu0
        %v603 = vpop.f32.mrf.mxu0
        %v604 = vadd.f32 %v523, %v603
        %v605 = vpop.f32.mrf.mxu0
        %606 = vmatprep.mubr.bf16.mxu0 0
        %607 = vmatmul.mubr.bf16.gmra.mxu0 %v548
        %v608 = vpop.f32.mrf.mxu0
        %v609 = vadd.f32 %v523, %v608
        %v610 = vpop.f32.mrf.mxu0
        %v611 = vpop.f32.mrf.mxu0
        %v612 = vadd.f32 %v523, %v611
        %v613 = vpop.f32.mrf.mxu0
        %614 = vdwg.mxu0
        %v615 = vmax.f32 %v585, 0.0
        %v616 = vmax.f32 %v588, 0.0
        %v617 = vmax.f32 %v593, 0.0
        %v618 = vmax.f32 %v596, 0.0
        %v619 = vmax.f32 %v601, 0.0
        %v620 = vmax.f32 %v604, 0.0
        %v621 = vmax.f32 %v609, 0.0
        %v622 = vmax.f32 %v612, 0.0
        %v623 = vpack.c.bf16 %v616, %v615
        %v624 = vpack.c.bf16 %v618, %v617
        %v625 = vpack.c.bf16 %v620, %v619
        %v626 = vpack.c.bf16 %v622, %v621
        %v627 = vld [vmem:[#allocation7] sm:$0xf]
        %v628 = vld [vmem:[#allocation7 + $0x4] sm:$0xf]
        %v629 = vld [vmem:[#allocation7 + $0x8] sm:$0xf]
        %v630 = vld [vmem:[#allocation7 + $0xc] sm:$0xf]
        %v631 = vld [vmem:[%s6] sm:$0x1]
        %v633 = vlaneseq
        %v634 = vshrl.u32 %v633, 7
        %v635 = vsub.s32 0, %v634
        %v636 = vrot.slane %v631, %v635
        %v642 = vunpack.c.l.b16 %v627
        %v643 = vunpack.c.l.b16 %v628
        %v644 = vunpack.c.l.b16 %v629
        %v645 = vunpack.c.l.b16 %v630
        %v646 = vpack.c.b16 %v643, %v642
        %v647 = vpack.c.b16 %v645, %v644
        %v651 = vsel %vm537, %v623, 0
        %v654 = vsel %vm537, %v624, 0
        %v657 = vsel %vm537, %v625, 0
        %v660 = vsel %vm537, %v626, 0
        %662 = vmatprep.subr.bf16.mxu0 0
        %663 = vmatpush1.bf16.msra.mxu0 0
        %664 = vmatprep.subr.bf16.mxu0 0
        %665 = vmatpush1.bf16.msra.mxu0 0
        %666 = vmatprep.subr.bf16.mxu0 0
        %667 = vmatpush1.bf16.msra.mxu0 0
        %668 = vmatprep.subr.bf16.mxu0 0
        %669 = vmatpush1.bf16.msra.mxu0 0
        %670 = vmatprep.subr.bf16.mxu0 0
        %671 = vmatpush1.bf16.msra.mxu0 0
        %672 = vmatprep.subr.bf16.mxu0 0
        %673 = vmatpush1.bf16.msra.mxu0 0
        %674 = vmatprep.subr.bf16.mxu0 0
        %675 = vmatpush1.bf16.msra.mxu0 %v647
        %676 = vmatprep.subr.bf16.mxu0 0
        %677 = vmatpush1.bf16.msra.mxu0 %v646
        %678 = vmatprep.subr.bf16.mxu0 0
        %679 = vmatpush2.bf16.msra.mxu0 0
        %680 = vmatprep.subr.bf16.mxu0 0
        %681 = vmatpush2.bf16.msra.mxu0 0
        %682 = vmatprep.subr.bf16.mxu0 0
        %683 = vmatpush2.bf16.msra.mxu0 0
        %684 = vmatprep.subr.bf16.mxu0 0
        %685 = vmatpush2.bf16.msra.mxu0 0
        %686 = vmatprep.subr.bf16.mxu0 0
        %687 = vmatpush2.bf16.msra.mxu0 0
        %688 = vmatprep.subr.bf16.mxu0 0
        %689 = vmatpush2.bf16.msra.mxu0 0
        %690 = vmatprep.subr.bf16.mxu0 0
        %691 = vmatpush2.bf16.msra.mxu0 0
        %692 = vmatprep.subr.bf16.mxu0 0
        %693 = vmatpush2.bf16.msra.mxu0 0
        %694 = vmatprep.mubr.bf16.mxu0 0
        %695 = vmatmul.mubr.bf16.gmra.mxu0 %v651
        %v696 = vpop.f32.mrf.mxu0
        %v697 = vadd.f32 %v636, %v696
        %v698 = vpop.f32.mrf.mxu0
        %v699 = vpop.f32.mrf.mxu0
        %v700 = vadd.f32 %v636, %v699
        %v701 = vpop.f32.mrf.mxu0
        %702 = vmatprep.mubr.bf16.mxu0 0
        %703 = vmatmul.mubr.bf16.gmra.mxu0 %v654
        %v704 = vpop.f32.mrf.mxu0
        %v705 = vadd.f32 %v636, %v704
        %v706 = vpop.f32.mrf.mxu0
        %v707 = vpop.f32.mrf.mxu0
        %v708 = vadd.f32 %v636, %v707
        %v709 = vpop.f32.mrf.mxu0
        %710 = vmatprep.mubr.bf16.mxu0 0
        %711 = vmatmul.mubr.bf16.gmra.mxu0 %v657
        %v712 = vpop.f32.mrf.mxu0
        %v713 = vadd.f32 %v636, %v712
        %v714 = vpop.f32.mrf.mxu0
        %v715 = vpop.f32.mrf.mxu0
        %v716 = vadd.f32 %v636, %v715
        %v717 = vpop.f32.mrf.mxu0
        %718 = vmatprep.mubr.bf16.mxu0 0
        %719 = vmatmul.mubr.bf16.gmra.mxu0 %v660
        %v720 = vpop.f32.mrf.mxu0
        %v721 = vadd.f32 %v636, %v720
        %v722 = vpop.f32.mrf.mxu0
        %v723 = vpop.f32.mrf.mxu0
        %v724 = vadd.f32 %v636, %v723
        %v725 = vpop.f32.mrf.mxu0
        %726 = vdwg.mxu0
        %v727 = vadd.f32 %v697, %v502
        %v728 = vadd.f32 %v700, %v503
        %v729 = vadd.f32 %v705, %v504
        %v730 = vadd.f32 %v708, %v505
        %v731 = vadd.f32 %v713, %v506
        %v732 = vadd.f32 %v716, %v507
        %v733 = vadd.f32 %v721, %v508
        %v734 = vadd.f32 %v724, %v509
        %v735 = vmax.f32 %v727, 0.0
        %v736 = vmax.f32 %v728, 0.0
        %v737 = vmax.f32 %v729, 0.0
        %v738 = vmax.f32 %v730, 0.0
        %v739 = vmax.f32 %v731, 0.0
        %v740 = vmax.f32 %v732, 0.0
        %v741 = vmax.f32 %v733, 0.0
        %v742 = vmax.f32 %v734, 0.0
        %v743 = vpack.c.bf16 %v736, %v735
        %v744 = vpack.c.bf16 %v738, %v737
        %v745 = vpack.c.bf16 %v740, %v739
        %v746 = vpack.c.bf16 %v742, %v741
        %s747 = scalar_lea.vmem [#allocation6], 16
        %v748 = vld [vmem:[%s747] sm:$0xf]
        %v749 = vld [vmem:[%s747 + $0x4] sm:$0xf]
        %v750 = vld [vmem:[%s747 + $0x8] sm:$0xf]
        %v751 = vld [vmem:[%s747 + $0xc] sm:$0xf]
        %s752 = scalar_lea.vmem %s4, 1
        %v753 = vld [vmem:[%s752] sm:$0x1]
        %v755 = vlaneseq
        %v756 = vshrl.u32 %v755, 7
        %v757 = vsub.s32 0, %v756
        %v758 = vrot.slane %v753, %v757
        %v764 = vunpack.c.l.b16 %v748
        %v765 = vunpack.c.l.b16 %v749
        %v766 = vunpack.c.l.b16 %v750
        %v767 = vunpack.c.l.b16 %v751
        %v768 = vpack.c.b16 %v765, %v764
        %v769 = vpack.c.b16 %v767, %v766
        %v773 = vsel %vm537, %v743, 0
        %v776 = vsel %vm537, %v744, 0
        %v779 = vsel %vm537, %v745, 0
        %v782 = vsel %vm537, %v746, 0
        %784 = vmatprep.subr.bf16.mxu0 0
        %785 = vmatpush1.bf16.msra.mxu0 0
        %786 = vmatprep.subr.bf16.mxu0 0
        %787 = vmatpush1.bf16.msra.mxu0 0
        %788 = vmatprep.subr.bf16.mxu0 0
        %789 = vmatpush1.bf16.msra.mxu0 0
        %790 = vmatprep.subr.bf16.mxu0 0
        %791 = vmatpush1.bf16.msra.mxu0 0
        %792 = vmatprep.subr.bf16.mxu0 0
        %793 = vmatpush1.bf16.msra.mxu0 0
        %794 = vmatprep.subr.bf16.mxu0 0
        %795 = vmatpush1.bf16.msra.mxu0 0
        %796 = vmatprep.subr.bf16.mxu0 0
        %797 = vmatpush1.bf16.msra.mxu0 %v769
        %798 = vmatprep.subr.bf16.mxu0 0
        %799 = vmatpush1.bf16.msra.mxu0 %v768
        %800 = vmatprep.subr.bf16.mxu0 0
        %801 = vmatpush2.bf16.msra.mxu0 0
        %802 = vmatprep.subr.bf16.mxu0 0
        %803 = vmatpush2.bf16.msra.mxu0 0
        %804 = vmatprep.subr.bf16.mxu0 0
        %805 = vmatpush2.bf16.msra.mxu0 0
        %806 = vmatprep.subr.bf16.mxu0 0
        %807 = vmatpush2.bf16.msra.mxu0 0
        %808 = vmatprep.subr.bf16.mxu0 0
        %809 = vmatpush2.bf16.msra.mxu0 0
        %810 = vmatprep.subr.bf16.mxu0 0
        %811 = vmatpush2.bf16.msra.mxu0 0
        %812 = vmatprep.subr.bf16.mxu0 0
        %813 = vmatpush2.bf16.msra.mxu0 0
        %814 = vmatprep.subr.bf16.mxu0 0
        %815 = vmatpush2.bf16.msra.mxu0 0
        %816 = vmatprep.mubr.bf16.mxu0 0
        %817 = vmatmul.mubr.bf16.gmra.mxu0 %v773
        %v818 = vpop.f32.mrf.mxu0
        %v819 = vadd.f32 %v758, %v818
        %v820 = vpop.f32.mrf.mxu0
        %v821 = vpop.f32.mrf.mxu0
        %v822 = vadd.f32 %v758, %v821
        %v823 = vpop.f32.mrf.mxu0
        %824 = vmatprep.mubr.bf16.mxu0 0
        %825 = vmatmul.mubr.bf16.gmra.mxu0 %v776
        %v826 = vpop.f32.mrf.mxu0
        %v827 = vadd.f32 %v758, %v826
        %v828 = vpop.f32.mrf.mxu0
        %v829 = vpop.f32.mrf.mxu0
        %v830 = vadd.f32 %v758, %v829
        %v831 = vpop.f32.mrf.mxu0
        %832 = vmatprep.mubr.bf16.mxu0 0
        %833 = vmatmul.mubr.bf16.gmra.mxu0 %v779
        %v834 = vpop.f32.mrf.mxu0
        %v835 = vadd.f32 %v758, %v834
        %v836 = vpop.f32.mrf.mxu0
        %v837 = vpop.f32.mrf.mxu0
        %v838 = vadd.f32 %v758, %v837
        %v839 = vpop.f32.mrf.mxu0
        %840 = vmatprep.mubr.bf16.mxu0 0
        %841 = vmatmul.mubr.bf16.gmra.mxu0 %v782
        %v842 = vpop.f32.mrf.mxu0
        %v843 = vadd.f32 %v758, %v842
        %v844 = vpop.f32.mrf.mxu0
        %v845 = vpop.f32.mrf.mxu0
        %v846 = vadd.f32 %v758, %v845
        %v847 = vpop.f32.mrf.mxu0
        %848 = vdwg.mxu0
        %v849 = vmax.f32 %v819, 0.0
        %v850 = vmax.f32 %v822, 0.0
        %v851 = vmax.f32 %v827, 0.0
        %v852 = vmax.f32 %v830, 0.0
        %v853 = vmax.f32 %v835, 0.0
        %v854 = vmax.f32 %v838, 0.0
        %v855 = vmax.f32 %v843, 0.0
        %v856 = vmax.f32 %v846, 0.0
        %v857 = vpack.c.bf16 %v850, %v849
        %v858 = vpack.c.bf16 %v852, %v851
        %v859 = vpack.c.bf16 %v854, %v853
        %v860 = vpack.c.bf16 %v856, %v855
        %s861 = scalar_lea.vmem [#allocation7], 16
        %v862 = vld [vmem:[%s861] sm:$0xf]
        %v863 = vld [vmem:[%s861 + $0x4] sm:$0xf]
        %v864 = vld [vmem:[%s861 + $0x8] sm:$0xf]
        %v865 = vld [vmem:[%s861 + $0xc] sm:$0xf]
        %s866 = scalar_lea.vmem %s6, 1
        %v867 = vld [vmem:[%s866] sm:$0x1]
        %v869 = vlaneseq
        %v870 = vshrl.u32 %v869, 7
        %v871 = vsub.s32 0, %v870
        %v872 = vrot.slane %v867, %v871
        %v878 = vunpack.c.l.b16 %v862
        %v879 = vunpack.c.l.b16 %v863
        %v880 = vunpack.c.l.b16 %v864
        %v881 = vunpack.c.l.b16 %v865
        %v882 = vpack.c.b16 %v879, %v878
        %v883 = vpack.c.b16 %v881, %v880
        %v887 = vsel %vm537, %v857, 0
        %v890 = vsel %vm537, %v858, 0
        %v893 = vsel %vm537, %v859, 0
        %v896 = vsel %vm537, %v860, 0
        %898 = vmatprep.subr.bf16.mxu0 0
        %899 = vmatpush1.bf16.msra.mxu0 0
        %900 = vmatprep.subr.bf16.mxu0 0
        %901 = vmatpush1.bf16.msra.mxu0 0
        %902 = vmatprep.subr.bf16.mxu0 0
        %903 = vmatpush1.bf16.msra.mxu0 0
        %904 = vmatprep.subr.bf16.mxu0 0
        %905 = vmatpush1.bf16.msra.mxu0 0
        %906 = vmatprep.subr.bf16.mxu0 0
        %907 = vmatpush1.bf16.msra.mxu0 0
        %908 = vmatprep.subr.bf16.mxu0 0
        %909 = vmatpush1.bf16.msra.mxu0 0
        %910 = vmatprep.subr.bf16.mxu0 0
        %911 = vmatpush1.bf16.msra.mxu0 %v883
        %912 = vmatprep.subr.bf16.mxu0 0
        %913 = vmatpush1.bf16.msra.mxu0 %v882
        %914 = vmatprep.subr.bf16.mxu0 0
        %915 = vmatpush2.bf16.msra.mxu0 0
        %916 = vmatprep.subr.bf16.mxu0 0
        %917 = vmatpush2.bf16.msra.mxu0 0
        %918 = vmatprep.subr.bf16.mxu0 0
        %919 = vmatpush2.bf16.msra.mxu0 0
        %920 = vmatprep.subr.bf16.mxu0 0
        %921 = vmatpush2.bf16.msra.mxu0 0
        %922 = vmatprep.subr.bf16.mxu0 0
        %923 = vmatpush2.bf16.msra.mxu0 0
        %924 = vmatprep.subr.bf16.mxu0 0
        %925 = vmatpush2.bf16.msra.mxu0 0
        %926 = vmatprep.subr.bf16.mxu0 0
        %927 = vmatpush2.bf16.msra.mxu0 0
        %928 = vmatprep.subr.bf16.mxu0 0
        %929 = vmatpush2.bf16.msra.mxu0 0
        %930 = vmatprep.mubr.bf16.mxu0 0
        %931 = vmatmul.mubr.bf16.gmra.mxu0 %v887
        %v932 = vpop.f32.mrf.mxu0
        %v933 = vadd.f32 %v872, %v932
        %v934 = vpop.f32.mrf.mxu0
        %v935 = vpop.f32.mrf.mxu0
        %v936 = vadd.f32 %v872, %v935
        %v937 = vpop.f32.mrf.mxu0
        %938 = vmatprep.mubr.bf16.mxu0 0
        %939 = vmatmul.mubr.bf16.gmra.mxu0 %v890
        %v940 = vpop.f32.mrf.mxu0
        %v941 = vadd.f32 %v872, %v940
        %v942 = vpop.f32.mrf.mxu0
        %v943 = vpop.f32.mrf.mxu0
        %v944 = vadd.f32 %v872, %v943
        %v945 = vpop.f32.mrf.mxu0
        %946 = vmatprep.mubr.bf16.mxu0 0
        %947 = vmatmul.mubr.bf16.gmra.mxu0 %v893
        %v948 = vpop.f32.mrf.mxu0
        %v949 = vadd.f32 %v872, %v948
        %v950 = vpop.f32.mrf.mxu0
        %v951 = vpop.f32.mrf.mxu0
        %v952 = vadd.f32 %v872, %v951
        %v953 = vpop.f32.mrf.mxu0
        %954 = vmatprep.mubr.bf16.mxu0 0
        %955 = vmatmul.mubr.bf16.gmra.mxu0 %v896
        %v956 = vpop.f32.mrf.mxu0
        %v957 = vadd.f32 %v872, %v956
        %v958 = vpop.f32.mrf.mxu0
        %v959 = vpop.f32.mrf.mxu0
        %v960 = vadd.f32 %v872, %v959
        %v961 = vpop.f32.mrf.mxu0
        %962 = vdwg.mxu0
        %v963 = vadd.f32 %v933, %v735
        %v964 = vadd.f32 %v936, %v736
        %v965 = vadd.f32 %v941, %v737
        %v966 = vadd.f32 %v944, %v738
        %v967 = vadd.f32 %v949, %v739
        %v968 = vadd.f32 %v952, %v740
        %v969 = vadd.f32 %v957, %v741
        %v970 = vadd.f32 %v960, %v742
        %v971 = vmax.f32 %v963, 0.0
        %v972 = vmax.f32 %v964, 0.0
        %v973 = vmax.f32 %v965, 0.0
        %v974 = vmax.f32 %v966, 0.0
        %v975 = vmax.f32 %v967, 0.0
        %v976 = vmax.f32 %v968, 0.0
        %v977 = vmax.f32 %v969, 0.0
        %v978 = vmax.f32 %v970, 0.0
        %v979 = vsel %vm537, %v971, -inf
        %v980 = vsel %vm537, %v972, -inf
        %v981 = vmax.f32 %v979, %v980
        %v982 = vrot.slane %v981, 4
        %v983 = vmax.f32 %v981, %v982
        %v984 = vrot.slane %v983, 2
        %v985 = vmax.f32 %v983, %v984
        %v986 = vrot.slane %v985, 1
        %v987 = vmax.f32 %v985, %v986
        %v988 = vsel %vm537, %v973, -inf
        %v989 = vsel %vm537, %v974, -inf
        %v990 = vmax.f32 %v988, %v989
        %v991 = vrot.slane %v990, 4
        %v992 = vmax.f32 %v990, %v991
        %v993 = vrot.slane %v992, 2
        %v994 = vmax.f32 %v992, %v993
        %v995 = vrot.slane %v994, 1
        %v996 = vmax.f32 %v994, %v995
        %v997 = vsel %vm537, %v975, -inf
        %v998 = vsel %vm537, %v976, -inf
        %v999 = vmax.f32 %v997, %v998
        %v1000 = vrot.slane %v999, 4
        %v1001 = vmax.f32 %v999, %v1000
        %v1002 = vrot.slane %v1001, 2
        %v1003 = vmax.f32 %v1001, %v1002
        %v1004 = vrot.slane %v1003, 1
        %v1005 = vmax.f32 %v1003, %v1004
        %v1006 = vsel %vm537, %v977, -inf
        %v1007 = vsel %vm537, %v978, -inf
        %v1008 = vmax.f32 %v1006, %v1007
        %v1009 = vrot.slane %v1008, 4
        %v1010 = vmax.f32 %v1008, %v1009
        %v1011 = vrot.slane %v1010, 2
        %v1012 = vmax.f32 %v1010, %v1011
        %v1013 = vrot.slane %v1012, 1
        %v1014 = vmax.f32 %v1012, %v1013
        %vm1019 = vcmask 1041409
        %v1020 = vsel %vm1019, %v996, %v987
        %vm1021 = vcmask 1042434
        %v1022 = vsel %vm1021, %v1005, %v1020
        %vm1023 = vcmask 1043459
        %v1024 = vsel %vm1023, %v1014, %v1022
        %1026 = vxpose.xlu0.b32.start [1/16] %v1024, 128
        %1027 = vxpose.xlu0.b32.cont [2/16] 0.0, 128
        %1028 = vxpose.xlu0.b32.cont [3/16] 0.0, 128
        %1029 = vxpose.xlu0.b32.cont [4/16] 0.0, 128
        %1030 = vxpose.xlu0.b32.cont [5/16] 0.0, 128
        %1031 = vxpose.xlu0.b32.cont [6/16] 0.0, 128
        %1032 = vxpose.xlu0.b32.cont [7/16] 0.0, 128
        %1033 = vxpose.xlu0.b32.cont [8/16] 0.0, 128
        %1034 = vxpose.xlu0.b32.cont [9/16] 0.0, 128
        %1035 = vxpose.xlu0.b32.cont [10/16] 0.0, 128
        %1036 = vxpose.xlu0.b32.cont [11/16] 0.0, 128
        %1037 = vxpose.xlu0.b32.cont [12/16] 0.0, 128
        %1038 = vxpose.xlu0.b32.cont [13/16] 0.0, 128
        %1039 = vxpose.xlu0.b32.cont [14/16] 0.0, 128
        %1040 = vxpose.xlu0.b32.cont [15/16] 0.0, 128
        %1041 = vxpose.xlu0.b32.end [16/16] 0.0, 128
        %v1042 = vpop.trf.xlu0
        %v1043 = vpop.trf.xlu0
        %v1044 = vpop.trf.xlu0
        %v1045 = vpop.trf.xlu0
        %v1046 = vpop.trf.xlu0
        %v1047 = vpop.trf.xlu0
        %v1048 = vpop.trf.xlu0
        %v1049 = vpop.trf.xlu0
        %v1050 = vpop.trf.xlu0
        %v1051 = vpop.trf.xlu0
        %v1052 = vpop.trf.xlu0
        %v1053 = vpop.trf.xlu0
        %v1054 = vpop.trf.xlu0
        %v1055 = vpop.trf.xlu0
        %v1056 = vpop.trf.xlu0
        %v1057 = vpop.trf.xlu0
        %vm1058 = vcmask 31744
        %1059 = vst.msk [vmem:[%s368] sm:$0xff] %vm1058, %v1042
        %1060 = vst.msk [vmem:[%s368 + $0x8] sm:$0xff] %vm1058, %v1043
        %1061 = vst.msk [vmem:[%s368 + $0x10] sm:$0xff] %vm1058, %v1044
        %1062 = vst.msk [vmem:[%s368 + $0x18] sm:$0xff] %vm1058, %v1045
        %p1063 = scmp.lt.s32.totalorder %s27, 1
        %s1064 = scalar_select %p1063, %s27, 1
        %p1065 = scmp.lt.s32.totalorder %s28, 0
        %s1066 = scalar_select %p1065, %s28, 0
        %s1067 = smul.addr %s1064, 4
        %s1068 = sadd.s32 %s1066, %s1067
        %s1069 = smul.addr %s1068, 8
        %s1070 = scalar_lea.vmem %s7, %s1069
        // Predicated region
        $region65: #{tpu_custom_call.1} parent=47 // pred_check
          %p1071 = pneg %p209
        $region66: #{tpu_custom_call.1} parent=47 // pred_check_branch
          %1073 = sbr.rel (%p1071) target = $region68
        $region67: #{tpu_custom_call.1} parent=47 // pred_region
          _
        $region68: #{tpu_custom_call.1} parent=47 // pred_fallthru
          _
      $region48: #{tpu_custom_call.1} parent=5 // pred_fallthru
        _
      %p1074 = scmp.le.s32.totalorder 2, %s18
      // Predicated region
      $region69: #{tpu_custom_call.1} parent=5 // pred_check
        %p1075 = pneg %p1074
      $region70: #{tpu_custom_call.1} parent=5 // pred_check_branch
        %1077 = sbr.rel (%p1075) target = $region72
      $region71: #{tpu_custom_call.1} parent=5 // pred_region
        %s1078 = ssub.s32 %s18, 2
        // Predicated region
        $region73: #{tpu_custom_call.1} parent=71 // pred_check
          %p1079 = pneg %p215
        $region74: #{tpu_custom_call.1} parent=71 // pred_check_branch
          %1081 = sbr.rel (%p1079) target = $region76
        $region75: #{tpu_custom_call.1} parent=71 // pred_region
          %p1082 = scmp.lt.s32.totalorder %s29, 1
          %s1083 = scalar_select %p1082, %s29, 1
          %p1084 = scmp.lt.s32.totalorder %s30, 0
          %s1085 = scalar_select %p1084, %s30, 0
          %s1086 = smul.addr %s1083, 4
          %s1087 = sadd.s32 %s1085, %s1086
          %s1088 = smul.addr %s1087, 8
          %s1089 = scalar_lea.vmem %s7, %s1088
        $region76: #{tpu_custom_call.1} parent=71 // pred_fallthru
          _
      $region72: #{tpu_custom_call.1} parent=5 // pred_fallthru
        _
    $region6: #{tpu_custom_call.1} parent=1 // loop_footer
      %s22 = sadd.s32 1, %s18
    $region7: #{tpu_custom_call.1} parent=1 // loop_footer_branch
      %17 = sbr.rel target = $region3
    $region8: #{tpu_custom_call.1} parent=1 // loop_exit
      _
    %1090 = vsyncpa [#allocation3], 1
    %s1091 = scalar_lea.sflag [#allocation3], 1
    %1092 = vsyncpa %s1091, 1
    %1093 = vsyncpa [#allocation5], 1
    %1094 = vsyncpa [#allocation8], 1

// kernel: tpu_custom_call.1
$region0: #{tpu_custom_call.1}
  #allocation0 [shape = 'u32[]', space=smem, size = 0x4, offset = 0x4, fixed_abs, tag = 'smem constant byte address 0x4 - core index']
  #allocation1 [shape = 'u32[144,128]{1,0:T(1,128)}', space=vmem, size = 0x12000, scoped, tag = 'internal scratch']
  %s0 = inlined_call_operand.hbm [shape: bf16[2,4,16,19], index: 0, kind: input, shape index: {}]
  %s1 = inlined_call_operand.hbm [shape: bf16[19,32], index: 1, kind: input, shape index: {}]
  %s2 = inlined_call_operand.vmem [shape: f32[1,32], index: 2, kind: input, shape index: {}]
  %s3 = inlined_call_operand.hbm [shape: bf16[2,32,32], index: 3, kind: input, shape index: {}]
  %s4 = inlined_call_operand.vmem [shape: f32[2,1,32], index: 4, kind: input, shape index: {}]
  %s5 = inlined_call_operand.hbm [shape: bf16[2,32,32], index: 5, kind: input, shape index: {}]
  %s6 = inlined_call_operand.vmem [shape: f32[2,1,32], index: 6, kind: input, shape index: {}]
  %s7 = inlined_call_operand.vmem [shape: f32[2,32,4], index: 7, kind: output, shape index: {}]
  %s8 = sld [smem:[#allocation0]]
  $region77: #{tpu_custom_call.1} parent=0
    _
  %s10 = ssub.s32 1, %s8
  %s11 = scalar_select 0, %s10, %s8
  $region1: #{tpu_custom_call.1} parent=0
    #allocation2 [shape = 'u8[32768]{0}', space=vmem, size = 0x8000, scoped, tag = 'input window, operand 0']
    #allocation3 [shape = 's32[2]{0}', space=sflag, size = 0x8, scoped, tag = 'scoped memory for tpu_custom_call.1']
    #allocation4 [shape = 'u8[6144]{0}', space=vmem, size = 0x1800, scoped, tag = 'input window, operand 1, single buffered']
    #allocation5 [shape = 's32[1]{0}', space=sflag, size = 0x4, scoped, tag = 'scoped memory for tpu_custom_call.1']
    #allocation6 [shape = 'u8[16384]{0}', space=vmem, size = 0x4000, scoped, tag = 'input window, operand 3, single buffered']
    #allocation7 [shape = 'u8[16384]{0}', space=vmem, size = 0x4000, scoped, tag = 'input window, operand 5, single buffered']
    #allocation8 [shape = 's32[1]{0}', space=sflag, size = 0x4, scoped, tag = 'scoped memory for tpu_custom_call.1']
    %12 = vsyncpa [#allocation3], 0
    %s13 = scalar_lea.sflag [#allocation3], 1
    %14 = vsyncpa %s13, 0
    %15 = vsyncpa [#allocation5], 0
    %16 = vsyncpa [#allocation8], 0
    loop: start=0, step=1, limit=4
    $region2: #{tpu_custom_call.1} parent=1 // loop_pre_header
      _
    $region3: #{tpu_custom_call.1} parent=1 // loop_header
      %s18 = sphi 0, %s22
      %p19 = scmp.ge.s32.totalorder %s18, 4
      %s25 = sphi 0, %s37
      %s26 = sphi 0, %s33
      %s27 = sphi 0, %s25
      %s28 = sphi 0, %s26
      %s29 = sphi 0, %s27
      %s30 = sphi 0, %s28
      %s42 = sphi 0, %s44
      %s45 = sphi 0, %s42
      %s46 = sphi 0, %s45
      %s62 = sphi 0, %s46
      %s66 = sphi 0, %s66
      %s68 = sphi 0, %s66
      %s69 = sphi 0, %s68
      %s83 = sphi 0, %s69
      %s87 = sphi 0, %s87
      %s89 = sphi 0, %s87
      %s90 = sphi 0, %s89
      %s104 = sphi 0, %s90
      %s108 = sphi 0, %s108
      %s110 = sphi 0, %s108
      %s111 = sphi 0, %s110
      %s125 = sphi 0, %s111
      %s129 = sphi 0, %s129
      %s131 = sphi 0, %s129
      %s132 = sphi 0, %s131
      %s146 = sphi 0, %s132
      %s150 = sphi 0, %s150
      %s152 = sphi 0, %s150
      %s153 = sphi 0, %s152
      %s167 = sphi 0, %s153
      %s171 = sphi 0, %s171
      %s173 = sphi 0, %s171
      %s174 = sphi 0, %s173
      %s188 = sphi 0, %s174
      %s196 = sphi 0, %s198
      %s199 = sphi 0, %s196
      %s200 = sphi 0, %s199
      %s216 = sphi 0, %s200
    $region4: #{tpu_custom_call.1} parent=1 // loop_header_branch
      %21 = sbr.rel (%p19) target = $region8
    $region5: #{tpu_custom_call.1} parent=1 // loop_body
      %s23 = ssub.s32 %s18, 1
      %s24 = ssub.s32 %s18, 2
      %s31 = sadd.s32 1, %s26
      %p32 = scmp.ge.s32.totalorder %s31, 1
      %s33 = scalar_select %p32, 0, %s31
      %s34 = sadd.s32 1, %s25
      %s35 = scalar_select %p32, %s34, %s25
      %p36 = scmp.ge.s32.totalorder %s35, 2
      %s37 = scalar_select %p36, 0, %s35
      %s38 = ssub.s32 %s25, %s37
      %s39 = ssub.s32 %s26, %s33
      %s40 = sor.u32 %s38, %s39
      %p41 = scmp.eq.s32.totalorder %s40, 0
      %s43 = sadd.s32 %s42, 1
      %s44 = scalar_select %p41, %s42, %s43
      %p47 = pneg %p41
      %p48 = scmp.eq.s32.totalorder %s18, 1
      %p49 = por %p47, %p48
      %p50 = scmp.ne.s32.totalorder %s42, %s45
      %p51 = scmp.eq.s32.totalorder %s18, 0
      %p52 = por %p50, %p51
      %p53 = scmp.ne.s32.totalorder %s42, %s45
      %p54 = scmp.eq.s32.totalorder %s23, 1
      %p55 = por %p53, %p54
      %p56 = scmp.ne.s32.totalorder %s45, %s46
      %p57 = scmp.eq.s32.totalorder %s23, 0
      %p58 = por %p56, %p57
      %p59 = scmp.ne.s32.totalorder %s45, %s46
      %p60 = scmp.eq.s32.totalorder %s24, 1
      %p61 = por %p59, %p60
      %p63 = scmp.ne.s32.totalorder %s46, %s62
      %p64 = scmp.eq.s32.totalorder %s24, 0
      %p65 = por %p63, %p64
      %s67 = sadd.s32 %s66, 1
      %p70 = scmp.eq.s32.totalorder %s18, 1
      %p71 = scmp.ne.s32.totalorder %s66, %s68
      %p72 = scmp.eq.s32.totalorder %s18, 0
      %p73 = por %p71, %p72
      %p74 = scmp.ne.s32.totalorder %s66, %s68
      %p75 = scmp.eq.s32.totalorder %s23, 1
      %p76 = por %p74, %p75
      %p77 = scmp.ne.s32.totalorder %s68, %s69
      %p78 = scmp.eq.s32.totalorder %s23, 0
      %p79 = por %p77, %p78
      %p80 = scmp.ne.s32.totalorder %s68, %s69
      %p81 = scmp.eq.s32.totalorder %s24, 1
      %p82 = por %p80, %p81
      %p84 = scmp.ne.s32.totalorder %s69, %s83
      %p85 = scmp.eq.s32.totalorder %s24, 0
      %p86 = por %p84, %p85
      %s88 = sadd.s32 %s87, 1
      %p91 = scmp.eq.s32.totalorder %s18, 1
      %p92 = scmp.ne.s32.totalorder %s87, %s89
      %p93 = scmp.eq.s32.totalorder %s18, 0
      %p94 = por %p92, %p93
      %p95 = scmp.ne.s32.totalorder %s87, %s89
      %p96 = scmp.eq.s32.totalorder %s23, 1
      %p97 = por %p95, %p96
      %p98 = scmp.ne.s32.totalorder %s89, %s90
      %p99 = scmp.eq.s32.totalorder %s23, 0
      %p100 = por %p98, %p99
      %p101 = scmp.ne.s32.totalorder %s89, %s90
      %p102 = scmp.eq.s32.totalorder %s24, 1
      %p103 = por %p101, %p102
      %p105 = scmp.ne.s32.totalorder %s90, %s104
      %p106 = scmp.eq.s32.totalorder %s24, 0
      %p107 = por %p105, %p106
      %s109 = sadd.s32 %s108, 1
      %p112 = scmp.eq.s32.totalorder %s18, 1
      %p113 = scmp.ne.s32.totalorder %s108, %s110
      %p114 = scmp.eq.s32.totalorder %s18, 0
      %p115 = por %p113, %p114
      %p116 = scmp.ne.s32.totalorder %s108, %s110
      %p117 = scmp.eq.s32.totalorder %s23, 1
      %p118 = por %p116, %p117
      %p119 = scmp.ne.s32.totalorder %s110, %s111
      %p120 = scmp.eq.s32.totalorder %s23, 0
      %p121 = por %p119, %p120
      %p122 = scmp.ne.s32.totalorder %s110, %s111
      %p123 = scmp.eq.s32.totalorder %s24, 1
      %p124 = por %p122, %p123
      %p126 = scmp.ne.s32.totalorder %s111, %s125
      %p127 = scmp.eq.s32.totalorder %s24, 0
      %p128 = por %p126, %p127
      %s130 = sadd.s32 %s129, 1
      %p133 = scmp.eq.s32.totalorder %s18, 1
      %p134 = scmp.ne.s32.totalorder %s129, %s131
      %p135 = scmp.eq.s32.totalorder %s18, 0
      %p136 = por %p134, %p135
      %p137 = scmp.ne.s32.totalorder %s129, %s131
      %p138 = scmp.eq.s32.totalorder %s23, 1
      %p139 = por %p137, %p138
      %p140 = scmp.ne.s32.totalorder %s131, %s132
      %p141 = scmp.eq.s32.totalorder %s23, 0
      %p142 = por %p140, %p141
      %p143 = scmp.ne.s32.totalorder %s131, %s132
      %p144 = scmp.eq.s32.totalorder %s24, 1
      %p145 = por %p143, %p144
      %p147 = scmp.ne.s32.totalorder %s132, %s146
      %p148 = scmp.eq.s32.totalorder %s24, 0
      %p149 = por %p147, %p148
      %s151 = sadd.s32 %s150, 1
      %p154 = scmp.eq.s32.totalorder %s18, 1
      %p155 = scmp.ne.s32.totalorder %s150, %s152
      %p156 = scmp.eq.s32.totalorder %s18, 0
      %p157 = por %p155, %p156
      %p158 = scmp.ne.s32.totalorder %s150, %s152
      %p159 = scmp.eq.s32.totalorder %s23, 1
      %p160 = por %p158, %p159
      %p161 = scmp.ne.s32.totalorder %s152, %s153
      %p162 = scmp.eq.s32.totalorder %s23, 0
      %p163 = por %p161, %p162
      %p164 = scmp.ne.s32.totalorder %s152, %s153
      %p165 = scmp.eq.s32.totalorder %s24, 1
      %p166 = por %p164, %p165
      %p168 = scmp.ne.s32.totalorder %s153, %s167
      %p169 = scmp.eq.s32.totalorder %s24, 0
      %p170 = por %p168, %p169
      %s172 = sadd.s32 %s171, 1
      %p175 = scmp.eq.s32.totalorder %s18, 1
      %p176 = scmp.ne.s32.totalorder %s171, %s173
      %p177 = scmp.eq.s32.totalorder %s18, 0
      %p178 = por %p176, %p177
      %p179 = scmp.ne.s32.totalorder %s171, %s173
      %p180 = scmp.eq.s32.totalorder %s23, 1
      %p181 = por %p179, %p180
      %p182 = scmp.ne.s32.totalorder %s173, %s174
      %p183 = scmp.eq.s32.totalorder %s23, 0
      %p184 = por %p182, %p183
      %p185 = scmp.ne.s32.totalorder %s173, %s174
      %p186 = scmp.eq.s32.totalorder %s24, 1
      %p187 = por %p185, %p186
      %p189 = scmp.ne.s32.totalorder %s174, %s188
      %p190 = scmp.eq.s32.totalorder %s24, 0
      %p191 = por %p189, %p190
      %s192 = ssub.s32 %s25, %s37
      %s193 = ssub.s32 %s26, %s33
      %s194 = sor.u32 %s192, %s193
      %p195 = scmp.eq.s32.totalorder %s194, 0
      %s197 = sadd.s32 %s196, 1
      %s198 = scalar_select %p195, %s196, %s197
      %p201 = pneg %p195
      %p202 = scmp.eq.s32.totalorder %s18, 1
      %p203 = por %p201, %p202
      %p204 = scmp.ne.s32.totalorder %s196, %s199
      %p205 = scmp.eq.s32.totalorder %s18, 0
      %p206 = por %p204, %p205
      %p207 = scmp.ne.s32.totalorder %s196, %s199
      %p208 = scmp.eq.s32.totalorder %s23, 1
      %p209 = por %p207, %p208
      %p210 = scmp.ne.s32.totalorder %s199, %s200
      %p211 = scmp.eq.s32.totalorder %s23, 0
      %p212 = por %p210, %p211
      %p213 = scmp.ne.s32.totalorder %s199, %s200
      %p214 = scmp.eq.s32.totalorder %s24, 1
      %p215 = por %p213, %p214
      %p217 = scmp.ne.s32.totalorder %s200, %s216
      %p218 = scmp.eq.s32.totalorder %s24, 0
      %p219 = por %p217, %p218
      %p220 = scmp.le.s32.totalorder 1, %s18
      %p221 = scmp.lt.s32.totalorder %s18, 3
      %p222 = pnand %p220, %p221
      %p223 = pneg %p222
      // Predicated region
      $region9: #{tpu_custom_call.1} parent=5 // pred_check
        _
      $region10: #{tpu_custom_call.1} parent=5 // pred_check_branch
        %225 = sbr.rel (%p222) target = $region12
      $region11: #{tpu_custom_call.1} parent=5 // pred_region
        %s226 = ssub.s32 %s18, 1
        // Predicated region
        $region13: #{tpu_custom_call.1} parent=11 // pred_check
          %p227 = pneg %p79
        $region14: #{tpu_custom_call.1} parent=11 // pred_check_branch
          %229 = sbr.rel (%p227) target = $region16
        $region15: #{tpu_custom_call.1} parent=11 // pred_region
          %s231 = ssub.s32 192, 192
          %232 = vsyncadd [#allocation5], %s231
          %s233 = sshll.u32 [#allocation4], 4
          %s234 = int_to_ptr.vmem [resolvable:$true] %s233
          %239 = dma.hbm_to_vmem [thread:$0]  %s1, 192, %s234, [#allocation5], 64, 64, 4
        $region16: #{tpu_custom_call.1} parent=11 // pred_fallthru
          _
        // Predicated region
        $region17: #{tpu_custom_call.1} parent=11 // pred_check
          %p240 = pneg %p100
        $region18: #{tpu_custom_call.1} parent=11 // pred_check_branch
          %242 = sbr.rel (%p240) target = $region20
        $region19: #{tpu_custom_call.1} parent=11 // pred_region
          _
        $region20: #{tpu_custom_call.1} parent=11 // pred_fallthru
          _
        // Predicated region
        $region21: #{tpu_custom_call.1} parent=11 // pred_check
          %p243 = pneg %p121
        $region22: #{tpu_custom_call.1} parent=11 // pred_check_branch
          %245 = sbr.rel (%p243) target = $region24
        $region23: #{tpu_custom_call.1} parent=11 // pred_region
          %s247 = ssub.s32 512, 512
          %248 = vsyncadd [#allocation5], %s247
          %s249 = sshll.u32 [#allocation6], 4
          %s250 = int_to_ptr.vmem [resolvable:$true] %s249
          %255 = dma.hbm_to_vmem [thread:$0]  %s3, 512, %s250, [#allocation5], 64, 64, 4
        $region24: #{tpu_custom_call.1} parent=11 // pred_fallthru
          _
        // Predicated region
        $region25: #{tpu_custom_call.1} parent=11 // pred_check
          %p256 = pneg %p142
        $region26: #{tpu_custom_call.1} parent=11 // pred_check_branch
          %258 = sbr.rel (%p256) target = $region28
        $region27: #{tpu_custom_call.1} parent=11 // pred_region
          _
        $region28: #{tpu_custom_call.1} parent=11 // pred_fallthru
          _
        // Predicated region
        $region29: #{tpu_custom_call.1} parent=11 // pred_check
          %p259 = pneg %p163
        $region30: #{tpu_custom_call.1} parent=11 // pred_check_branch
          %261 = sbr.rel (%p259) target = $region32
        $region31: #{tpu_custom_call.1} parent=11 // pred_region
          %s263 = ssub.s32 512, 512
          %264 = vsyncadd [#allocation8], %s263
          %s265 = sshll.u32 [#allocation7], 4
          %s266 = int_to_ptr.vmem [resolvable:$true] %s265
          %271 = dma.hbm_to_vmem [thread:$0]  %s5, 512, %s266, [#allocation8], 64, 64, 4
        $region32: #{tpu_custom_call.1} parent=11 // pred_fallthru
          _
        // Predicated region
        $region33: #{tpu_custom_call.1} parent=11 // pred_check
          %p272 = pneg %p184
        $region34: #{tpu_custom_call.1} parent=11 // pred_check_branch
          %274 = sbr.rel (%p272) target = $region36
        $region35: #{tpu_custom_call.1} parent=11 // pred_region
          _
        $region36: #{tpu_custom_call.1} parent=11 // pred_fallthru
          _
      $region12: #{tpu_custom_call.1} parent=5 // pred_fallthru
        _
      %p275 = scmp.lt.s32.totalorder %s18, 2
      // Predicated region
      $region37: #{tpu_custom_call.1} parent=5 // pred_check
        %p276 = pneg %p275
      $region38: #{tpu_custom_call.1} parent=5 // pred_check_branch
        %278 = sbr.rel (%p276) target = $region40
      $region39: #{tpu_custom_call.1} parent=5 // pred_region
        // Predicated region
        $region41: #{tpu_custom_call.1} parent=39 // pred_check
          %p279 = pneg %p52
        $region42: #{tpu_custom_call.1} parent=39 // pred_check_branch
          %281 = sbr.rel (%p279) target = $region44
        $region43: #{tpu_custom_call.1} parent=39 // pred_region
          %s282 = sand.u32 %s42, 1
          %s283 = scalar_lea.sflag [#allocation3], %s282
          %s284 = sand.u32 %s42, 1
          %s285 = smul.addr %s284, 32
          %s286 = scalar_lea.vmem [#allocation2], %s285
          %s287 = smul.u32 4, %s26
          %s289 = ssub.s32 512, 512
          %290 = vsyncadd %s283, %s289
          %s291 = smul.addr %s287, 2
          %s292 = smul.addr %s25, 8
          %s293 = sadd.s32 %s291, %s292
          %s294 = smul.addr %s293, 64
          %s295 = scalar_lea.hbm %s0, %s294
          %s296 = sshll.u32 %s286, 4
          %s297 = int_to_ptr.vmem [resolvable:$true] %s296
          %302 = dma.hbm_to_vmem [thread:$0]  %s295, 512, %s297, %s283, 64, 64, 4
        $region44: #{tpu_custom_call.1} parent=39 // pred_fallthru
          _
      $region40: #{tpu_custom_call.1} parent=5 // pred_fallthru
        _
      %p303 = scmp.le.s32.totalorder 1, %s18
      %p304 = scmp.lt.s32.totalorder %s18, 3
      %p305 = pnand %p303, %p304
      %p306 = pneg %p305
      // Predicated region
      $region45: #{tpu_custom_call.1} parent=5 // pred_check
        _
      $region46: #{tpu_custom_call.1} parent=5 // pred_check_branch
        %308 = sbr.rel (%p305) target = $region48
      $region47: #{tpu_custom_call.1} parent=5 // pred_region
        %s309 = ssub.s32 %s18, 1
        %s310 = sand.u32 %s45, 1
        %s311 = scalar_lea.sflag [#allocation3], %s310
        %s312 = sand.u32 %s45, 1
        %s313 = smul.addr %s312, 32
        %s314 = scalar_lea.vmem [#allocation2], %s313
        // Predicated region
        $region49: #{tpu_custom_call.1} parent=47 // pred_check
          %p315 = pneg %p58
        $region50: #{tpu_custom_call.1} parent=47 // pred_check_branch
          %317 = sbr.rel (%p315) target = $region52
        $region51: #{tpu_custom_call.1} parent=47 // pred_region
          %318 = dma.done %s311, 512
        $region52: #{tpu_custom_call.1} parent=47 // pred_fallthru
          _
        // Predicated region
        $region53: #{tpu_custom_call.1} parent=47 // pred_check
          %p319 = pneg %p79
        $region54: #{tpu_custom_call.1} parent=47 // pred_check_branch
          %321 = sbr.rel (%p319) target = $region56
        $region55: #{tpu_custom_call.1} parent=47 // pred_region
          %322 = dma.done [#allocation5], 192
        $region56: #{tpu_custom_call.1} parent=47 // pred_fallthru
          _
        // Predicated region
        $region57: #{tpu_custom_call.1} parent=47 // pred_check
          %p323 = pneg %p121
        $region58: #{tpu_custom_call.1} parent=47 // pred_check_branch
          %325 = sbr.rel (%p323) target = $region60
        $region59: #{tpu_custom_call.1} parent=47 // pred_region
          %326 = dma.done [#allocation5], 512
        $region60: #{tpu_custom_call.1} parent=47 // pred_fallthru
          _
        // Predicated region
        $region61: #{tpu_custom_call.1} parent=47 // pred_check
          %p327 = pneg %p163
        $region62: #{tpu_custom_call.1} parent=47 // pred_check_branch
          %329 = sbr.rel (%p327) target = $region64
        $region63: #{tpu_custom_call.1} parent=47 // pred_region
          %330 = dma.done [#allocation8], 512
        $region64: #{tpu_custom_call.1} parent=47 // pred_fallthru
          _
        %s331 = sand.u32 %s45, 1
        %s332 = scalar_lea.sflag [#allocation3], %s331
        %s333 = sand.u32 %s45, 1
        %s334 = smul.addr %s333, 32
        %s335 = scalar_lea.vmem [#allocation2], %s334
        %p336 = pneg %p58
        %p337 = pneg %p55
        %p338 = pneg %p79
        %p339 = pneg %p76
        %p340 = pneg %p100
        %p341 = pneg %p97
        %p342 = pneg %p121
        %p343 = pneg %p118
        %p344 = pneg %p142
        %p345 = pneg %p139
        %p346 = pneg %p163
        %p347 = pneg %p160
        %p348 = pneg %p184
        %p349 = pneg %p181
        %p350 = pneg %p212
        %p351 = pneg %p209
        %p352 = scmp.lt.s32.totalorder %s27, 1
        %s353 = scalar_select %p352, %s27, 1
        %p354 = scmp.lt.s32.totalorder %s28, 0
        %s355 = scalar_select %p354, %s28, 0
        %s356 = smul.addr %s353, 4
        %s357 = sadd.s32 %s355, %s356
        %s358 = smul.addr %s357, 8
        %s359 = scalar_lea.vmem %s7, %s358
        %s360 = smul.u32 4, %s28
        %p361 = scmp.lt.s32.totalorder %s27, 1
        %s362 = scalar_select %p361, %s27, 1
        %p363 = scmp.lt.s32.totalorder %s28, 0
        %s364 = scalar_select %p363, %s28, 0
        %s365 = smul.addr %s362, 4
        %s366 = sadd.s32 %s364, %s365
        %s367 = smul.addr %s366, 8
        %s368 = scalar_lea.vmem %s7, %s367
        %v370 = vld [vmem:[%s314] sm:$0xf]
        %v371 = vld [vmem:[%s314 + $0x4] sm:$0xf]
        %v372 = vld [vmem:[%s314 + $0x8] sm:$0xf]
        %v373 = vld [vmem:[%s314 + $0xc] sm:$0xf]
        %v374 = vld [vmem:[%s314 + $0x10] sm:$0xf]
        %v375 = vld [vmem:[%s314 + $0x14] sm:$0xf]
        %v376 = vld [vmem:[%s314 + $0x18] sm:$0xf]
        %v377 = vld [vmem:[%s314 + $0x1c] sm:$0xf]
        %v378 = vld [vmem:[#allocation4] sm:$0xf]
        %v379 = vld [vmem:[#allocation4 + $0x4] sm:$0xf]
        %v380 = vld [vmem:[#allocation4 + $0x8] sm:$0x3]
        %v381 = vld [vmem:[%s2] sm:$0x1]
        %v383 = vlaneseq
        %v384 = vshrl.u32 %v383, 7
        %v385 = vsub.s32 0, %v384
        %v386 = vrot.slane %v381, %v385
        %v396 = vunpack.c.l.b16 %v370
        %v397 = vunpack.c.l.b16 %v371
        %v398 = vunpack.c.l.b16 %v372
        %v399 = vunpack.c.l.b16 %v373
        %v400 = vunpack.c.l.b16 %v374
        %v401 = vunpack.c.l.b16 %v375
        %v402 = vunpack.c.l.b16 %v376
        %v403 = vunpack.c.l.b16 %v377
        %v404 = vpack.c.b16 %v397, %v396
        %v405 = vpack.c.b16 %v399, %v398
        %v406 = vpack.c.b16 %v401, %v400
        %v407 = vpack.c.b16 %v403, %v402
        %v411 = vunpack.c.l.b16 %v378
        %v412 = vunpack.c.l.b16 %v379
        %v413 = vunpack.c.l.b16 %v380
        %v414 = vpack.c.b16 %v412, %v411
        %v415 = vpack.c.b16 %v413, %v413
        %vm417 = vcmask 154624
        %v419 = vsel %vm417, %v404, 0
        %v422 = vsel %vm417, %v405, 0
        %v425 = vsel %vm417, %v406, 0
        %v428 = vsel %vm417, %v407, 0
        %vm430 = vcmask 1040384
        %vm431 = vcmask 1041408
        %v432 = vsel %vm430, 4294967295, 65535
        %v433 = vsel %vm431, %v432, 0
        %v435 = vand.u32 %v415, %v433
        %437 = vmatprep.subr.bf16.mxu0 0
        %438 = vmatpush1.bf16.msra.mxu0 0
        %439 = vmatprep.subr.bf16.mxu0 0
        %440 = vmatpush1.bf16.msra.mxu0 0
        %441 = vmatprep.subr.bf16.mxu0 0
        %442 = vmatpush1.bf16.msra.mxu0 0
        %443 = vmatprep.subr.bf16.mxu0 0
        %444 = vmatpush1.bf16.msra.mxu0 0
        %445 = vmatprep.subr.bf16.mxu0 0
        %446 = vmatpush1.bf16.msra.mxu0 0
        %447 = vmatprep.subr.bf16.mxu0 0
        %448 = vmatpush1.bf16.msra.mxu0 0
        %449 = vmatprep.subr.bf16.mxu0 0
        %450 = vmatpush1.bf16.msra.mxu0 %v435
        %451 = vmatprep.subr.bf16.mxu0 0
        %452 = vmatpush1.bf16.msra.mxu0 %v414
        %453 = vmatprep.subr.bf16.mxu0 0
        %454 = vmatpush2.bf16.msra.mxu0 0
        %455 = vmatprep.subr.bf16.mxu0 0
        %456 = vmatpush2.bf16.msra.mxu0 0
        %457 = vmatprep.subr.bf16.mxu0 0
        %458 = vmatpush2.bf16.msra.mxu0 0
        %459 = vmatprep.subr.bf16.mxu0 0
        %460 = vmatpush2.bf16.msra.mxu0 0
        %461 = vmatprep.subr.bf16.mxu0 0
        %462 = vmatpush2.bf16.msra.mxu0 0
        %463 = vmatprep.subr.bf16.mxu0 0
        %464 = vmatpush2.bf16.msra.mxu0 0
        %465 = vmatprep.subr.bf16.mxu0 0
        %466 = vmatpush2.bf16.msra.mxu0 0
        %467 = vmatprep.subr.bf16.mxu0 0
        %468 = vmatpush2.bf16.msra.mxu0 0
        %469 = vmatprep.mubr.bf16.mxu0 0
        %470 = vmatmul.mubr.bf16.gmra.mxu0 %v419
        %v471 = vpop.f32.mrf.mxu0
        %v472 = vadd.f32 %v386, %v471
        %v473 = vpop.f32.mrf.mxu0
        %v474 = vpop.f32.mrf.mxu0
        %v475 = vadd.f32 %v386, %v474
        %v476 = vpop.f32.mrf.mxu0
        %477 = vmatprep.mubr.bf16.mxu0 0
        %478 = vmatmul.mubr.bf16.gmra.mxu0 %v422
        %v479 = vpop.f32.mrf.mxu0
        %v480 = vadd.f32 %v386, %v479
        %v481 = vpop.f32.mrf.mxu0
        %v482 = vpop.f32.mrf.mxu0
        %v483 = vadd.f32 %v386, %v482
        %v484 = vpop.f32.mrf.mxu0
        %485 = vmatprep.mubr.bf16.mxu0 0
        %486 = vmatmul.mubr.bf16.gmra.mxu0 %v425
        %v487 = vpop.f32.mrf.mxu0
        %v488 = vadd.f32 %v386, %v487
        %v489 = vpop.f32.mrf.mxu0
        %v490 = vpop.f32.mrf.mxu0
        %v491 = vadd.f32 %v386, %v490
        %v492 = vpop.f32.mrf.mxu0
        %493 = vmatprep.mubr.bf16.mxu0 0
        %494 = vmatmul.mubr.bf16.gmra.mxu0 %v428
        %v495 = vpop.f32.mrf.mxu0
        %v496 = vadd.f32 %v386, %v495
        %v497 = vpop.f32.mrf.mxu0
        %v498 = vpop.f32.mrf.mxu0
        %v499 = vadd.f32 %v386, %v498
        %v500 = vpop.f32.mrf.mxu0
        %501 = vdwg.mxu0
        %v502 = vmax.f32 %v472, 0.0
        %v503 = vmax.f32 %v475, 0.0
        %v504 = vmax.f32 %v480, 0.0
        %v505 = vmax.f32 %v483, 0.0
        %v506 = vmax.f32 %v488, 0.0
        %v507 = vmax.f32 %v491, 0.0
        %v508 = vmax.f32 %v496, 0.0
        %v509 = vmax.f32 %v499, 0.0
        %v510 = vpack.c.bf16 %v503, %v502
        %v511 = vpack.c.bf16 %v505, %v504
        %v512 = vpack.c.bf16 %v507, %v506
        %v513 = vpack.c.bf16 %v509, %v508
        %v514 = vld [vmem:[#allocation6] sm:$0xf]
        %v515 = vld [vmem:[#allocation6 + $0x4] sm:$0xf]
        %v516 = vld [vmem:[#allocation6 + $0x8] sm:$0xf]
        %v517 = vld [vmem:[#allocation6 + $0xc] sm:$0xf]
        %v518 = vld [vmem:[%s4] sm:$0x1]
        %v520 = vlaneseq
        %v521 = vshrl.u32 %v520, 7
        %v522 = vsub.s32 0, %v521
        %v523 = vrot.slane %v518, %v522
        %v529 = vunpack.c.l.b16 %v514
        %v530 = vunpack.c.l.b16 %v515
        %v531 = vunpack.c.l.b16 %v516
        %v532 = vunpack.c.l.b16 %v517
        %v533 = vpack.c.b16 %v530, %v529
        %v534 = vpack.c.b16 %v532, %v531
        %vm537 = vcmask 261120
        %v539 = vsel %vm537, %v510, 0
        %v542 = vsel %vm537, %v511, 0
        %v545 = vsel %vm537, %v512, 0
        %v548 = vsel %vm537, %v513, 0
        %550 = vmatprep.subr.bf16.mxu0 0
        %551 = vmatpush1.bf16.msra.mxu0 0
        %552 = vmatprep.subr.bf16.mxu0 0
        %553 = vmatpush1.bf16.msra.mxu0 0
        %554 = vmatprep.subr.bf16.mxu0 0
        %555 = vmatpush1.bf16.msra.mxu0 0
        %556 = vmatprep.subr.bf16.mxu0 0
        %557 = vmatpush1.bf16.msra.mxu0 0
        %558 = vmatprep.subr.bf16.mxu0 0
        %559 = vmatpush1.bf16.msra.mxu0 0
        %560 = vmatprep.subr.bf16.mxu0 0
        %561 = vmatpush1.bf16.msra.mxu0 0
        %562 = vmatprep.subr.bf16.mxu0 0
        %563 = vmatpush1.bf16.msra.mxu0 %v534
        %564 = vmatprep.subr.bf16.mxu0 0
        %565 = vmatpush1.bf16.msra.mxu0 %v533
        %566 = vmatprep.subr.bf16.mxu0 0
        %567 = vmatpush2.bf16.msra.mxu0 0
        %568 = vmatprep.subr.bf16.mxu0 0
        %569 = vmatpush2.bf16.msra.mxu0 0
        %570 = vmatprep.subr.bf16.mxu0 0
        %571 = vmatpush2.bf16.msra.mxu0 0
        %572 = vmatprep.subr.bf16.mxu0 0
        %573 = vmatpush2.bf16.msra.mxu0 0
        %574 = vmatprep.subr.bf16.mxu0 0
        %575 = vmatpush2.bf16.msra.mxu0 0
        %576 = vmatprep.subr.bf16.mxu0 0
        %577 = vmatpush2.bf16.msra.mxu0 0
        %578 = vmatprep.subr.bf16.mxu0 0
        %579 = vmatpush2.bf16.msra.mxu0 0
        %580 = vmatprep.subr.bf16.mxu0 0
        %581 = vmatpush2.bf16.msra.mxu0 0
        %582 = vmatprep.mubr.bf16.mxu0 0
        %583 = vmatmul.mubr.bf16.gmra.mxu0 %v539
        %v584 = vpop.f32.mrf.mxu0
        %v585 = vadd.f32 %v523, %v584
        %v586 = vpop.f32.mrf.mxu0
        %v587 = vpop.f32.mrf.mxu0
        %v588 = vadd.f32 %v523, %v587
        %v589 = vpop.f32.mrf.mxu0
        %590 = vmatprep.mubr.bf16.mxu0 0
        %591 = vmatmul.mubr.bf16.gmra.mxu0 %v542
        %v592 = vpop.f32.mrf.mxu0
        %v593 = vadd.f32 %v523, %v592
        %v594 = vpop.f32.mrf.mxu0
        %v595 = vpop.f32.mrf.mxu0
        %v596 = vadd.f32 %v523, %v595
        %v597 = vpop.f32.mrf.mxu0
        %598 = vmatprep.mubr.bf16.mxu0 0
        %599 = vmatmul.mubr.bf16.gmra.mxu0 %v545
        %v600 = vpop.f32.mrf.mxu0
        %v601 = vadd.f32 %v523, %v600
        %v602 = vpop.f32.mrf.mxu0
        %v603 = vpop.f32.mrf.mxu0
        %v604 = vadd.f32 %v523, %v603
        %v605 = vpop.f32.mrf.mxu0
        %606 = vmatprep.mubr.bf16.mxu0 0
        %607 = vmatmul.mubr.bf16.gmra.mxu0 %v548
        %v608 = vpop.f32.mrf.mxu0
        %v609 = vadd.f32 %v523, %v608
        %v610 = vpop.f32.mrf.mxu0
        %v611 = vpop.f32.mrf.mxu0
        %v612 = vadd.f32 %v523, %v611
        %v613 = vpop.f32.mrf.mxu0
        %614 = vdwg.mxu0
        %v615 = vmax.f32 %v585, 0.0
        %v616 = vmax.f32 %v588, 0.0
        %v617 = vmax.f32 %v593, 0.0
        %v618 = vmax.f32 %v596, 0.0
        %v619 = vmax.f32 %v601, 0.0
        %v620 = vmax.f32 %v604, 0.0
        %v621 = vmax.f32 %v609, 0.0
        %v622 = vmax.f32 %v612, 0.0
        %v623 = vpack.c.bf16 %v616, %v615
        %v624 = vpack.c.bf16 %v618, %v617
        %v625 = vpack.c.bf16 %v620, %v619
        %v626 = vpack.c.bf16 %v622, %v621
        %v627 = vld [vmem:[#allocation7] sm:$0xf]
        %v628 = vld [vmem:[#allocation7 + $0x4] sm:$0xf]
        %v629 = vld [vmem:[#allocation7 + $0x8] sm:$0xf]
        %v630 = vld [vmem:[#allocation7 + $0xc] sm:$0xf]
        %v631 = vld [vmem:[%s6] sm:$0x1]
        %v633 = vlaneseq
        %v634 = vshrl.u32 %v633, 7
        %v635 = vsub.s32 0, %v634
        %v636 = vrot.slane %v631, %v635
        %v642 = vunpack.c.l.b16 %v627
        %v643 = vunpack.c.l.b16 %v628
        %v644 = vunpack.c.l.b16 %v629
        %v645 = vunpack.c.l.b16 %v630
        %v646 = vpack.c.b16 %v643, %v642
        %v647 = vpack.c.b16 %v645, %v644
        %v651 = vsel %vm537, %v623, 0
        %v654 = vsel %vm537, %v624, 0
        %v657 = vsel %vm537, %v625, 0
        %v660 = vsel %vm537, %v626, 0
        %662 = vmatprep.subr.bf16.mxu0 0
        %663 = vmatpush1.bf16.msra.mxu0 0
        %664 = vmatprep.subr.bf16.mxu0 0
        %665 = vmatpush1.bf16.msra.mxu0 0
        %666 = vmatprep.subr.bf16.mxu0 0
        %667 = vmatpush1.bf16.msra.mxu0 0
        %668 = vmatprep.subr.bf16.mxu0 0
        %669 = vmatpush1.bf16.msra.mxu0 0
        %670 = vmatprep.subr.bf16.mxu0 0
        %671 = vmatpush1.bf16.msra.mxu0 0
        %672 = vmatprep.subr.bf16.mxu0 0
        %673 = vmatpush1.bf16.msra.mxu0 0
        %674 = vmatprep.subr.bf16.mxu0 0
        %675 = vmatpush1.bf16.msra.mxu0 %v647
        %676 = vmatprep.subr.bf16.mxu0 0
        %677 = vmatpush1.bf16.msra.mxu0 %v646
        %678 = vmatprep.subr.bf16.mxu0 0
        %679 = vmatpush2.bf16.msra.mxu0 0
        %680 = vmatprep.subr.bf16.mxu0 0
        %681 = vmatpush2.bf16.msra.mxu0 0
        %682 = vmatprep.subr.bf16.mxu0 0
        %683 = vmatpush2.bf16.msra.mxu0 0
        %684 = vmatprep.subr.bf16.mxu0 0
        %685 = vmatpush2.bf16.msra.mxu0 0
        %686 = vmatprep.subr.bf16.mxu0 0
        %687 = vmatpush2.bf16.msra.mxu0 0
        %688 = vmatprep.subr.bf16.mxu0 0
        %689 = vmatpush2.bf16.msra.mxu0 0
        %690 = vmatprep.subr.bf16.mxu0 0
        %691 = vmatpush2.bf16.msra.mxu0 0
        %692 = vmatprep.subr.bf16.mxu0 0
        %693 = vmatpush2.bf16.msra.mxu0 0
        %694 = vmatprep.mubr.bf16.mxu0 0
        %695 = vmatmul.mubr.bf16.gmra.mxu0 %v651
        %v696 = vpop.f32.mrf.mxu0
        %v697 = vadd.f32 %v636, %v696
        %v698 = vpop.f32.mrf.mxu0
        %v699 = vpop.f32.mrf.mxu0
        %v700 = vadd.f32 %v636, %v699
        %v701 = vpop.f32.mrf.mxu0
        %702 = vmatprep.mubr.bf16.mxu0 0
        %703 = vmatmul.mubr.bf16.gmra.mxu0 %v654
        %v704 = vpop.f32.mrf.mxu0
        %v705 = vadd.f32 %v636, %v704
        %v706 = vpop.f32.mrf.mxu0
        %v707 = vpop.f32.mrf.mxu0
        %v708 = vadd.f32 %v636, %v707
        %v709 = vpop.f32.mrf.mxu0
        %710 = vmatprep.mubr.bf16.mxu0 0
        %711 = vmatmul.mubr.bf16.gmra.mxu0 %v657
        %v712 = vpop.f32.mrf.mxu0
        %v713 = vadd.f32 %v636, %v712
        %v714 = vpop.f32.mrf.mxu0
        %v715 = vpop.f32.mrf.mxu0
        %v716 = vadd.f32 %v636, %v715
        %v717 = vpop.f32.mrf.mxu0
        %718 = vmatprep.mubr.bf16.mxu0 0
        %719 = vmatmul.mubr.bf16.gmra.mxu0 %v660
        %v720 = vpop.f32.mrf.mxu0
        %v721 = vadd.f32 %v636, %v720
        %v722 = vpop.f32.mrf.mxu0
        %v723 = vpop.f32.mrf.mxu0
        %v724 = vadd.f32 %v636, %v723
        %v725 = vpop.f32.mrf.mxu0
        %726 = vdwg.mxu0
        %v727 = vadd.f32 %v697, %v502
        %v728 = vadd.f32 %v700, %v503
        %v729 = vadd.f32 %v705, %v504
        %v730 = vadd.f32 %v708, %v505
        %v731 = vadd.f32 %v713, %v506
        %v732 = vadd.f32 %v716, %v507
        %v733 = vadd.f32 %v721, %v508
        %v734 = vadd.f32 %v724, %v509
        %v735 = vmax.f32 %v727, 0.0
        %v736 = vmax.f32 %v728, 0.0
        %v737 = vmax.f32 %v729, 0.0
        %v738 = vmax.f32 %v730, 0.0
        %v739 = vmax.f32 %v731, 0.0
        %v740 = vmax.f32 %v732, 0.0
        %v741 = vmax.f32 %v733, 0.0
        %v742 = vmax.f32 %v734, 0.0
        %v743 = vpack.c.bf16 %v736, %v735
        %v744 = vpack.c.bf16 %v738, %v737
        %v745 = vpack.c.bf16 %v740, %v739
        %v746 = vpack.c.bf16 %v742, %v741
        %s747 = scalar_lea.vmem [#allocation6], 16
        %v748 = vld [vmem:[%s747] sm:$0xf]
        %v749 = vld [vmem:[%s747 + $0x4] sm:$0xf]
        %v750 = vld [vmem:[%s747 + $0x8] sm:$0xf]
        %v751 = vld [vmem:[%s747 + $0xc] sm:$0xf]
        %s752 = scalar_lea.vmem %s4, 1
        %v753 = vld [vmem:[%s752] sm:$0x1]
        %v755 = vlaneseq
        %v756 = vshrl.u32 %v755, 7
        %v757 = vsub.s32 0, %v756
        %v758 = vrot.slane %v753, %v757
        %v764 = vunpack.c.l.b16 %v748
        %v765 = vunpack.c.l.b16 %v749
        %v766 = vunpack.c.l.b16 %v750
        %v767 = vunpack.c.l.b16 %v751
        %v768 = vpack.c.b16 %v765, %v764
        %v769 = vpack.c.b16 %v767, %v766
        %v773 = vsel %vm537, %v743, 0
        %v776 = vsel %vm537, %v744, 0
        %v779 = vsel %vm537, %v745, 0
        %v782 = vsel %vm537, %v746, 0
        %784 = vmatprep.subr.bf16.mxu0 0
        %785 = vmatpush1.bf16.msra.mxu0 0
        %786 = vmatprep.subr.bf16.mxu0 0
        %787 = vmatpush1.bf16.msra.mxu0 0
        %788 = vmatprep.subr.bf16.mxu0 0
        %789 = vmatpush1.bf16.msra.mxu0 0
        %790 = vmatprep.subr.bf16.mxu0 0
        %791 = vmatpush1.bf16.msra.mxu0 0
        %792 = vmatprep.subr.bf16.mxu0 0
        %793 = vmatpush1.bf16.msra.mxu0 0
        %794 = vmatprep.subr.bf16.mxu0 0
        %795 = vmatpush1.bf16.msra.mxu0 0
        %796 = vmatprep.subr.bf16.mxu0 0
        %797 = vmatpush1.bf16.msra.mxu0 %v769
        %798 = vmatprep.subr.bf16.mxu0 0
        %799 = vmatpush1.bf16.msra.mxu0 %v768
        %800 = vmatprep.subr.bf16.mxu0 0
        %801 = vmatpush2.bf16.msra.mxu0 0
        %802 = vmatprep.subr.bf16.mxu0 0
        %803 = vmatpush2.bf16.msra.mxu0 0
        %804 = vmatprep.subr.bf16.mxu0 0
        %805 = vmatpush2.bf16.msra.mxu0 0
        %806 = vmatprep.subr.bf16.mxu0 0
        %807 = vmatpush2.bf16.msra.mxu0 0
        %808 = vmatprep.subr.bf16.mxu0 0
        %809 = vmatpush2.bf16.msra.mxu0 0
        %810 = vmatprep.subr.bf16.mxu0 0
        %811 = vmatpush2.bf16.msra.mxu0 0
        %812 = vmatprep.subr.bf16.mxu0 0
        %813 = vmatpush2.bf16.msra.mxu0 0
        %814 = vmatprep.subr.bf16.mxu0 0
        %815 = vmatpush2.bf16.msra.mxu0 0
        %816 = vmatprep.mubr.bf16.mxu0 0
        %817 = vmatmul.mubr.bf16.gmra.mxu0 %v773
        %v818 = vpop.f32.mrf.mxu0
        %v819 = vadd.f32 %v758, %v818
        %v820 = vpop.f32.mrf.mxu0
        %v821 = vpop.f32.mrf.mxu0
        %v822 = vadd.f32 %v758, %v821
        %v823 = vpop.f32.mrf.mxu0
        %824 = vmatprep.mubr.bf16.mxu0 0
        %825 = vmatmul.mubr.bf16.gmra.mxu0 %v776
        %v826 = vpop.f32.mrf.mxu0
        %v827 = vadd.f32 %v758, %v826
        %v828 = vpop.f32.mrf.mxu0
        %v829 = vpop.f32.mrf.mxu0
        %v830 = vadd.f32 %v758, %v829
        %v831 = vpop.f32.mrf.mxu0
        %832 = vmatprep.mubr.bf16.mxu0 0
        %833 = vmatmul.mubr.bf16.gmra.mxu0 %v779
        %v834 = vpop.f32.mrf.mxu0
        %v835 = vadd.f32 %v758, %v834
        %v836 = vpop.f32.mrf.mxu0
        %v837 = vpop.f32.mrf.mxu0
        %v838 = vadd.f32 %v758, %v837
        %v839 = vpop.f32.mrf.mxu0
        %840 = vmatprep.mubr.bf16.mxu0 0
        %841 = vmatmul.mubr.bf16.gmra.mxu0 %v782
        %v842 = vpop.f32.mrf.mxu0
        %v843 = vadd.f32 %v758, %v842
        %v844 = vpop.f32.mrf.mxu0
        %v845 = vpop.f32.mrf.mxu0
        %v846 = vadd.f32 %v758, %v845
        %v847 = vpop.f32.mrf.mxu0
        %848 = vdwg.mxu0
        %v849 = vmax.f32 %v819, 0.0
        %v850 = vmax.f32 %v822, 0.0
        %v851 = vmax.f32 %v827, 0.0
        %v852 = vmax.f32 %v830, 0.0
        %v853 = vmax.f32 %v835, 0.0
        %v854 = vmax.f32 %v838, 0.0
        %v855 = vmax.f32 %v843, 0.0
        %v856 = vmax.f32 %v846, 0.0
        %v857 = vpack.c.bf16 %v850, %v849
        %v858 = vpack.c.bf16 %v852, %v851
        %v859 = vpack.c.bf16 %v854, %v853
        %v860 = vpack.c.bf16 %v856, %v855
        %s861 = scalar_lea.vmem [#allocation7], 16
        %v862 = vld [vmem:[%s861] sm:$0xf]
        %v863 = vld [vmem:[%s861 + $0x4] sm:$0xf]
        %v864 = vld [vmem:[%s861 + $0x8] sm:$0xf]
        %v865 = vld [vmem:[%s861 + $0xc] sm:$0xf]
        %s866 = scalar_lea.vmem %s6, 1
        %v867 = vld [vmem:[%s866] sm:$0x1]
        %v869 = vlaneseq
        %v870 = vshrl.u32 %v869, 7
        %v871 = vsub.s32 0, %v870
        %v872 = vrot.slane %v867, %v871
        %v878 = vunpack.c.l.b16 %v862
        %v879 = vunpack.c.l.b16 %v863
        %v880 = vunpack.c.l.b16 %v864
        %v881 = vunpack.c.l.b16 %v865
        %v882 = vpack.c.b16 %v879, %v878
        %v883 = vpack.c.b16 %v881, %v880
        %v887 = vsel %vm537, %v857, 0
        %v890 = vsel %vm537, %v858, 0
        %v893 = vsel %vm537, %v859, 0
        %v896 = vsel %vm537, %v860, 0
        %898 = vmatprep.subr.bf16.mxu0 0
        %899 = vmatpush1.bf16.msra.mxu0 0
        %900 = vmatprep.subr.bf16.mxu0 0
        %901 = vmatpush1.bf16.msra.mxu0 0
        %902 = vmatprep.subr.bf16.mxu0 0
        %903 = vmatpush1.bf16.msra.mxu0 0
        %904 = vmatprep.subr.bf16.mxu0 0
        %905 = vmatpush1.bf16.msra.mxu0 0
        %906 = vmatprep.subr.bf16.mxu0 0
        %907 = vmatpush1.bf16.msra.mxu0 0
        %908 = vmatprep.subr.bf16.mxu0 0
        %909 = vmatpush1.bf16.msra.mxu0 0
        %910 = vmatprep.subr.bf16.mxu0 0
        %911 = vmatpush1.bf16.msra.mxu0 %v883
        %912 = vmatprep.subr.bf16.mxu0 0
        %913 = vmatpush1.bf16.msra.mxu0 %v882
        %914 = vmatprep.subr.bf16.mxu0 0
        %915 = vmatpush2.bf16.msra.mxu0 0
        %916 = vmatprep.subr.bf16.mxu0 0
        %917 = vmatpush2.bf16.msra.mxu0 0
        %918 = vmatprep.subr.bf16.mxu0 0
        %919 = vmatpush2.bf16.msra.mxu0 0
        %920 = vmatprep.subr.bf16.mxu0 0
        %921 = vmatpush2.bf16.msra.mxu0 0
        %922 = vmatprep.subr.bf16.mxu0 0
        %923 = vmatpush2.bf16.msra.mxu0 0
        %924 = vmatprep.subr.bf16.mxu0 0
        %925 = vmatpush2.bf16.msra.mxu0 0
        %926 = vmatprep.subr.bf16.mxu0 0
        %927 = vmatpush2.bf16.msra.mxu0 0
        %928 = vmatprep.subr.bf16.mxu0 0
        %929 = vmatpush2.bf16.msra.mxu0 0
        %930 = vmatprep.mubr.bf16.mxu0 0
        %931 = vmatmul.mubr.bf16.gmra.mxu0 %v887
        %v932 = vpop.f32.mrf.mxu0
        %v933 = vadd.f32 %v872, %v932
        %v934 = vpop.f32.mrf.mxu0
        %v935 = vpop.f32.mrf.mxu0
        %v936 = vadd.f32 %v872, %v935
        %v937 = vpop.f32.mrf.mxu0
        %938 = vmatprep.mubr.bf16.mxu0 0
        %939 = vmatmul.mubr.bf16.gmra.mxu0 %v890
        %v940 = vpop.f32.mrf.mxu0
        %v941 = vadd.f32 %v872, %v940
        %v942 = vpop.f32.mrf.mxu0
        %v943 = vpop.f32.mrf.mxu0
        %v944 = vadd.f32 %v872, %v943
        %v945 = vpop.f32.mrf.mxu0
        %946 = vmatprep.mubr.bf16.mxu0 0
        %947 = vmatmul.mubr.bf16.gmra.mxu0 %v893
        %v948 = vpop.f32.mrf.mxu0
        %v949 = vadd.f32 %v872, %v948
        %v950 = vpop.f32.mrf.mxu0
        %v951 = vpop.f32.mrf.mxu0
        %v952 = vadd.f32 %v872, %v951
        %v953 = vpop.f32.mrf.mxu0
        %954 = vmatprep.mubr.bf16.mxu0 0
        %955 = vmatmul.mubr.bf16.gmra.mxu0 %v896
        %v956 = vpop.f32.mrf.mxu0
        %v957 = vadd.f32 %v872, %v956
        %v958 = vpop.f32.mrf.mxu0
        %v959 = vpop.f32.mrf.mxu0
        %v960 = vadd.f32 %v872, %v959
        %v961 = vpop.f32.mrf.mxu0
        %962 = vdwg.mxu0
        %v963 = vadd.f32 %v933, %v735
        %v964 = vadd.f32 %v936, %v736
        %v965 = vadd.f32 %v941, %v737
        %v966 = vadd.f32 %v944, %v738
        %v967 = vadd.f32 %v949, %v739
        %v968 = vadd.f32 %v952, %v740
        %v969 = vadd.f32 %v957, %v741
        %v970 = vadd.f32 %v960, %v742
        %v971 = vmax.f32 %v963, 0.0
        %v972 = vmax.f32 %v964, 0.0
        %v973 = vmax.f32 %v965, 0.0
        %v974 = vmax.f32 %v966, 0.0
        %v975 = vmax.f32 %v967, 0.0
        %v976 = vmax.f32 %v968, 0.0
        %v977 = vmax.f32 %v969, 0.0
        %v978 = vmax.f32 %v970, 0.0
        %v979 = vsel %vm537, %v971, -inf
        %v980 = vsel %vm537, %v972, -inf
        %v981 = vmax.f32 %v979, %v980
        %v982 = vrot.slane %v981, 4
        %v983 = vmax.f32 %v981, %v982
        %v984 = vrot.slane %v983, 2
        %v985 = vmax.f32 %v983, %v984
        %v986 = vrot.slane %v985, 1
        %v987 = vmax.f32 %v985, %v986
        %v988 = vsel %vm537, %v973, -inf
        %v989 = vsel %vm537, %v974, -inf
        %v990 = vmax.f32 %v988, %v989
        %v991 = vrot.slane %v990, 4
        %v992 = vmax.f32 %v990, %v991
        %v993 = vrot.slane %v992, 2
        %v994 = vmax.f32 %v992, %v993
        %v995 = vrot.slane %v994, 1
        %v996 = vmax.f32 %v994, %v995
        %v997 = vsel %vm537, %v975, -inf
        %v998 = vsel %vm537, %v976, -inf
        %v999 = vmax.f32 %v997, %v998
        %v1000 = vrot.slane %v999, 4
        %v1001 = vmax.f32 %v999, %v1000
        %v1002 = vrot.slane %v1001, 2
        %v1003 = vmax.f32 %v1001, %v1002
        %v1004 = vrot.slane %v1003, 1
        %v1005 = vmax.f32 %v1003, %v1004
        %v1006 = vsel %vm537, %v977, -inf
        %v1007 = vsel %vm537, %v978, -inf
        %v1008 = vmax.f32 %v1006, %v1007
        %v1009 = vrot.slane %v1008, 4
        %v1010 = vmax.f32 %v1008, %v1009
        %v1011 = vrot.slane %v1010, 2
        %v1012 = vmax.f32 %v1010, %v1011
        %v1013 = vrot.slane %v1012, 1
        %v1014 = vmax.f32 %v1012, %v1013
        %vm1019 = vcmask 1041409
        %v1020 = vsel %vm1019, %v996, %v987
        %vm1021 = vcmask 1042434
        %v1022 = vsel %vm1021, %v1005, %v1020
        %vm1023 = vcmask 1043459
        %v1024 = vsel %vm1023, %v1014, %v1022
        %1026 = vxpose.xlu0.b32.start [1/16] %v1024, 128
        %1027 = vxpose.xlu0.b32.cont [2/16] 0.0, 128
        %1028 = vxpose.xlu0.b32.cont [3/16] 0.0, 128
        %1029 = vxpose.xlu0.b32.cont [4/16] 0.0, 128
        %1030 = vxpose.xlu0.b32.cont [5/16] 0.0, 128
        %1031 = vxpose.xlu0.b32.cont [6/16] 0.0, 128
        %1032 = vxpose.xlu0.b32.cont [7/16] 0.0, 128
        %1033 = vxpose.xlu0.b32.cont [8/16] 0.0, 128
        %1034 = vxpose.xlu0.b32.cont [9/16] 0.0, 128
        %1035 = vxpose.xlu0.b32.cont [10/16] 0.0, 128
        %1036 = vxpose.xlu0.b32.cont [11/16] 0.0, 128
        %1037 = vxpose.xlu0.b32.cont [12/16] 0.0, 128
        %1038 = vxpose.xlu0.b32.cont [13/16] 0.0, 128
        %1039 = vxpose.xlu0.b32.cont [14/16] 0.0, 128
        %1040 = vxpose.xlu0.b32.cont [15/16] 0.0, 128
        %1041 = vxpose.xlu0.b32.end [16/16] 0.0, 128
        %v1042 = vpop.trf.xlu0
        %v1043 = vpop.trf.xlu0
        %v1044 = vpop.trf.xlu0
        %v1045 = vpop.trf.xlu0
        %v1046 = vpop.trf.xlu0
        %v1047 = vpop.trf.xlu0
        %v1048 = vpop.trf.xlu0
        %v1049 = vpop.trf.xlu0
        %v1050 = vpop.trf.xlu0
        %v1051 = vpop.trf.xlu0
        %v1052 = vpop.trf.xlu0
        %v1053 = vpop.trf.xlu0
        %v1054 = vpop.trf.xlu0
        %v1055 = vpop.trf.xlu0
        %v1056 = vpop.trf.xlu0
        %v1057 = vpop.trf.xlu0
        %vm1058 = vcmask 31744
        %1059 = vst.msk [vmem:[%s368] sm:$0xff] %vm1058, %v1042
        %1060 = vst.msk [vmem:[%s368 + $0x8] sm:$0xff] %vm1058, %v1043
        %1061 = vst.msk [vmem:[%s368 + $0x10] sm:$0xff] %vm1058, %v1044
        %1062 = vst.msk [vmem:[%s368 + $0x18] sm:$0xff] %vm1058, %v1045
        %p1063 = scmp.lt.s32.totalorder %s27, 1
        %s1064 = scalar_select %p1063, %s27, 1
        %p1065 = scmp.lt.s32.totalorder %s28, 0
        %s1066 = scalar_select %p1065, %s28, 0
        %s1067 = smul.addr %s1064, 4
        %s1068 = sadd.s32 %s1066, %s1067
        %s1069 = smul.addr %s1068, 8
        %s1070 = scalar_lea.vmem %s7, %s1069
        // Predicated region
        $region65: #{tpu_custom_call.1} parent=47 // pred_check
          %p1071 = pneg %p209
        $region66: #{tpu_custom_call.1} parent=47 // pred_check_branch
          %1073 = sbr.rel (%p1071) target = $region68
        $region67: #{tpu_custom_call.1} parent=47 // pred_region
          _
        $region68: #{tpu_custom_call.1} parent=47 // pred_fallthru
          _
      $region48: #{tpu_custom_call.1} parent=5 // pred_fallthru
        _
      %p1074 = scmp.le.s32.totalorder 2, %s18
      // Predicated region
      $region69: #{tpu_custom_call.1} parent=5 // pred_check
        %p1075 = pneg %p1074
      $region70: #{tpu_custom_call.1} parent=5 // pred_check_branch
        %1077 = sbr.rel (%p1075) target = $region72
      $region71: #{tpu_custom_call.1} parent=5 // pred_region
        %s1078 = ssub.s32 %s18, 2
        // Predicated region
        $region73: #{tpu_custom_call.1} parent=71 // pred_check
          %p1079 = pneg %p215
        $region74: #{tpu_custom_call.1} parent=71 // pred_check_branch
          %1081 = sbr.rel (%p1079) target = $region76
        $region75: #{tpu_custom_call.1} parent=71 // pred_region
          %p1082 = scmp.lt.s32.totalorder %s29, 1
          %s1083 = scalar_select %p1082, %s29, 1
          %p1084 = scmp.lt.s32.totalorder %s30, 0
          %s1085 = scalar_select %p1084, %s30, 0
          %s1086 = smul.addr %s1083, 4
          %s1087 = sadd.s32 %s1085, %s1086
          %s1088 = smul.addr %s1087, 8
          %s1089 = scalar_lea.vmem %s7, %s1088
        $region76: #{tpu_custom_call.1} parent=71 // pred_fallthru
          _
      $region72: #{tpu_custom_call.1} parent=5 // pred_fallthru
        _
    $region6: #{tpu_custom_call.1} parent=1 // loop_footer
      %s22 = sadd.s32 1, %s18
    $region7: #{tpu_custom_call.1} parent=1 // loop_footer_branch
      %17 = sbr.rel target = $region3
    $region8: #{tpu_custom_call.1} parent=1 // loop_exit
      _
    %1090 = vsyncpa [#allocation3], 1
    %s1091 = scalar_lea.sflag [#allocation3], 1
    %1092 = vsyncpa %s1091, 1
    %1093 = vsyncpa [#allocation5], 1
    %1094 = vsyncpa [#allocation8], 1

</llo_original>
